<compile_context>
chip_gen: v7x
topology: tpu7x:2x2x1
jax: 0.10.0
libtpu: 0.0.40
codegen_flags: <defaults>
</compile_context>

<pallas_src>
import functools

import jax
import jax.numpy as jnp
from jax import lax
from jax.experimental import pallas as pl
from jax.experimental.pallas import tpu as pltpu

LANES = 128


def _round_up(x, m):
    return (x + m - 1) // m * m


def _pick_row_tile(hout, stride, wp, chp, budget_bytes=4 << 20):
    """Largest divisor of hout whose hidden VMEM scratch fits budget_bytes."""
    best = 1
    for cand in range(1, hout + 1):
        if hout % cand:
            continue
        th_in = (cand - 1) * stride + 3
        if th_in * wp * chp * 4 <= budget_bytes:
            best = cand
    return best


# ---------------------------------------------------------------------------
# Fused kernel: expand(1x1)+BN+ReLU6 -> dw3x3+BN+ReLU6 -> project(1x1)+BN (+res)
# BN scales are pre-folded into the weights; only biases appear in-kernel.
# ---------------------------------------------------------------------------
def _fused_block_kernel(*refs, stride, th, H, W, Wout, has_expand, use_res,
                        cp, chp, coutp):
    if has_expand:
        (x_ref, we_ref, be_ref,
         wd_ref, bd_ref,
         wp_ref, bp_ref,
         o_ref, hid_ref) = refs
    else:
        (x_ref,
         wd_ref, bd_ref,
         wp_ref, bp_ref,
         o_ref, hid_ref) = refs

    wp_full = x_ref.shape[1]              # spatially padded width (static)
    th_in = (th - 1) * stride + 3         # hidden rows needed incl. 1-row halo

    hb = pl.program_id(1)
    r0 = pl.multiple_of(hb * (th * stride), th * stride)   # first padded row

    # --- Stage 1: 1x1 expand (scale-folded) + bias + ReLU6, VMEM-only hidden -
    xwin = x_ref[pl.ds(r0, th_in), :, :]                    # (th_in, Wp, cp)
    if has_expand:
        x2d = xwin.reshape(th_in * wp_full, cp)
        t = jnp.dot(x2d, we_ref[...], preferred_element_type=jnp.float32)
        t = t + be_ref[...]
        t = jnp.clip(t, 0.0, 6.0).reshape(th_in, wp_full, chp)
        # Zero the conv "same" padding ring: x is zero there, but the folded
        # BN bias (then ReLU6) would otherwise leak a nonzero value in.
        rows = r0 + lax.broadcasted_iota(jnp.int32, (th_in, wp_full, chp), 0)
        cols = lax.broadcasted_iota(jnp.int32, (th_in, wp_full, chp), 1)
        valid = (rows >= 1) & (rows <= H) & (cols >= 1) & (cols <= W)
        hid_ref[...] = jnp.where(valid, t, 0.0)
    else:
        # expand_ratio == 1: hidden == (channel-padded) input; pad ring is 0.
        hid_ref[...] = xwin.astype(jnp.float32)

    # --- Stage 2: 3x3 depthwise (scale-folded) + bias + ReLU6 (dense in W) ---
    wdw = wd_ref[...]                                       # (3, 3, chp), once
    acc = jnp.zeros((th, W, chp), jnp.float32)
    for dy in range(3):                                     # 9 taps, unrolled
        for dx in range(3):
            if stride == 1:
                patch = hid_ref[dy:dy + th, dx:dx + W, :]
            else:
                # stride only on the (major) H axis = pure addressing
                patch = hid_ref[pl.ds(dy, th, stride=stride), pl.ds(dx, W), :]
            acc = acc + patch * wdw[dy:dy + 1, dx:dx + 1, :]
    y = jnp.clip(acc + bd_ref[...], 0.0, 6.0)
    if stride != 1:
        # one W-subsample at the end instead of 9 strided sublane slices
        y = lax.slice(y, (0, 0, 0), (th, W, chp), (1, stride, 1))

    # --- Stage 3: 1x1 project (scale-folded) + bias (+ fused residual) -------
    y2d = y.reshape(th * Wout, chp)
    out = jnp.dot(y2d, wp_ref[...], preferred_element_type=jnp.float32)
    out = out + bp_ref[...]
    if use_res:                                             # stride==1, inp==oup
        res = x_ref[pl.ds(r0 + 1, th), pl.ds(1, W), :].astype(jnp.float32)
        out = out + res.reshape(th * Wout, coutp)
    o_ref[...] = out.reshape(th, Wout, coutp).astype(o_ref.dtype)


# ---------------------------------------------------------------------------
# Wrapper (NHWC core)
# ---------------------------------------------------------------------------
def _fused_inverted_residual(x_nhwc, params, *, inp, oup, stride, expand_ratio):
    N, H, W, _ = x_nhwc.shape
    hidden = int(round(inp * expand_ratio))
    has_expand = expand_ratio != 1
    use_res = (stride == 1 and inp == oup)

    cp = _round_up(inp, LANES)           # padded input channels (lanes)
    chp = _round_up(hidden, LANES)       # padded hidden channels (lanes)
    coutp = _round_up(oup, LANES)        # padded output channels (lanes)
    if not has_expand:
        assert cp == chp
    if use_res:
        assert cp == coutp

    Hout = (H + 2 - 3) // stride + 1
    Wout = (W + 2 - 3) // stride + 1
    Wp = _round_up(W + 2, 8)             # padded width (sublane multiple)
    Hp = H + 2

    th = _pick_row_tile(Hout, stride, Wp, chp)   # output rows per grid step
    th_in = (th - 1) * stride + 3                # hidden rows incl. halo
    n_hblocks = Hout // th

    # Host-side prep: pad ONLY the small input -- 1-pixel spatial halo ring,
    # W rounded up to a sublane multiple, channels to 128 lanes.
    xp = jnp.pad(x_nhwc, ((0, 0), (1, 1), (1, Wp - W - 1), (0, cp - inp)))

    def padc(v, c_to):
        pads = [(0, 0)] * v.ndim
        pads[-1] = (0, c_to - v.shape[-1])
        return jnp.pad(v, pads)

    # Fold BatchNorm scale into the conv weights (host-side, one-time).
    w_dw = padc(params["w_dw"] * params["s_dw"], chp)         # (3, 3, chp)
    b_dw = padc(params["b_dw"], chp).reshape(1, 1, chp)
    w_pr = jnp.pad(params["w_proj"] * params["s_proj"][None, :],
                   ((0, chp - hidden), (0, coutp - oup)))
    b_pr = padc(params["b_proj"], coutp).reshape(1, coutp)

    args = [xp]
    in_specs = [pl.BlockSpec((None, Hp, Wp, cp), lambda n, h: (n, 0, 0, 0))]
    if has_expand:
        w_ex = jnp.pad(params["w_exp"] * params["s_exp"][None, :],
                       ((0, cp - inp), (0, chp - hidden)))
        b_ex = padc(params["b_exp"], chp).reshape(1, chp)
        args += [w_ex, b_ex]
        in_specs += [
            pl.BlockSpec((cp, chp), lambda n, h: (0, 0)),
            pl.BlockSpec((1, chp), lambda n, h: (0, 0)),
        ]
    args += [w_dw, b_dw, w_pr, b_pr]
    in_specs += [
        pl.BlockSpec((3, 3, chp), lambda n, h: (0, 0, 0)),
        pl.BlockSpec((1, 1, chp), lambda n, h: (0, 0, 0)),
        pl.BlockSpec((chp, coutp), lambda n, h: (0, 0)),
        pl.BlockSpec((1, coutp), lambda n, h: (0, 0)),
    ]

    kernel = functools.partial(
        _fused_block_kernel, stride=stride, th=th, H=H, W=W, Wout=Wout,
        has_expand=has_expand, use_res=use_res, cp=cp, chp=chp, coutp=coutp)

    out_p = pl.pallas_call(
        kernel,
        out_shape=jax.ShapeDtypeStruct((N, Hout, Wout, coutp), x_nhwc.dtype),
        grid=(N, n_hblocks),
        in_specs=in_specs,
        out_specs=pl.BlockSpec((None, th, Wout, coutp),
                               lambda n, h: (n, h, 0, 0)),
        scratch_shapes=[pltpu.VMEM((th_in, Wp, chp), jnp.float32)],
        compiler_params=pltpu.CompilerParams(
            dimension_semantics=("parallel", "parallel"),
            vmem_limit_bytes=32 * 1024 * 1024),
    )(*args)

    return out_p[..., :oup]                                   # drop padded lanes


def inverted_residual_forward(x_nchw, params, *, inp, oup, stride, expand_ratio):
    # NCHW (PyTorch) boundary; kernel runs NHWC.
    x = jnp.transpose(x_nchw, (0, 2, 3, 1))
    y = _fused_inverted_residual(x, params, inp=inp, oup=oup,
                                 stride=stride, expand_ratio=expand_ratio)
    return jnp.transpose(y, (0, 3, 1, 2))


# ---------------------------------------------------------------------------
# Deterministic parameter construction (synthetic, no checkpoint)
# ---------------------------------------------------------------------------
def init_params(key, inp, oup, expand_ratio):
    hidden = int(round(inp * expand_ratio))
    keys = jax.random.split(key, 16)
    eps = 1e-5

    def bn_fold(kg, kb, km, kv, c):
        gamma = 1.0 + 0.1 * jax.random.normal(kg, (c,), jnp.float32)
        beta = 0.1 * jax.random.normal(kb, (c,), jnp.float32)
        mean = 0.1 * jax.random.normal(km, (c,), jnp.float32)
        var = jax.random.uniform(kv, (c,), jnp.float32, 0.5, 1.5)
        scale = gamma / jnp.sqrt(var + eps)
        bias = beta - mean * scale
        return scale, bias

    params = {}
    if expand_ratio != 1:
        # PyTorch weight (hidden, inp, 1, 1) -> matmul form (inp, hidden)
        params["w_exp"] = 0.1 * jax.random.normal(keys[0], (inp, hidden), jnp.float32)
        params["s_exp"], params["b_exp"] = bn_fold(keys[1], keys[2], keys[3], keys[4], hidden)
    # PyTorch depthwise weight (hidden, 1, 3, 3) -> (3, 3, hidden)
    params["w_dw"] = 0.1 * jax.random.normal(keys[5], (3, 3, hidden), jnp.float32)
    params["s_dw"], params["b_dw"] = bn_fold(keys[6], keys[7], keys[8], keys[9], hidden)
    # PyTorch weight (oup, hidden, 1, 1) -> (hidden, oup)
    params["w_proj"] = 0.1 * jax.random.normal(keys[10], (hidden, oup), jnp.float32)
    params["s_proj"], params["b_proj"] = bn_fold(keys[11], keys[12], keys[13], keys[14], oup)
    return params


# ---------------------------------------------------------------------------
# Pure-JAX reference (lax convolutions) for a numerical self-check
# ---------------------------------------------------------------------------
def _reference_forward(x_nchw, params, *, inp, oup, stride, expand_ratio):
    hidden = int(round(inp * expand_ratio))
    prec = lax.Precision.HIGHEST
    dn = ("NCHW", "OIHW", "NCHW")
    h = x_nchw
    if expand_ratio != 1:
        w = params["w_exp"].T.reshape(hidden, inp, 1, 1)
        h = lax.conv_general_dilated(h, w, (1, 1), "VALID",
                                     dimension_numbers=dn, precision=prec)
        h = h * params["s_exp"].reshape(1, -1, 1, 1) + params["b_exp"].reshape(1, -1, 1, 1)
        h = jnp.clip(h, 0.0, 6.0)
    wdw = jnp.transpose(params["w_dw"], (2, 0, 1)).reshape(hidden, 1, 3, 3)
    h = lax.conv_general_dilated(h, wdw, (stride, stride), ((1, 1), (1, 1)),
                                 dimension_numbers=dn,
                                 feature_group_count=hidden, precision=prec)
    h = h * params["s_dw"].reshape(1, -1, 1, 1) + params["b_dw"].reshape(1, -1, 1, 1)
    h = jnp.clip(h, 0.0, 6.0)
    wp = params["w_proj"].T.reshape(oup, hidden, 1, 1)
    h = lax.conv_general_dilated(h, wp, (1, 1), "VALID",
                                 dimension_numbers=dn, precision=prec)
    h = h * params["s_proj"].reshape(1, -1, 1, 1) + params["b_proj"].reshape(1, -1, 1, 1)
    if stride == 1 and inp == oup:
        h = h + x_nchw
    return h


if __name__ == "__main__":
    inp, oup, stride, expand_ratio = 4, 4, 1, 6    # use_res_connect = True
    key = jax.random.PRNGKey(0)
    kx, kp = jax.random.split(key)

    x = jax.random.normal(kx, (2, inp, 16, 16), dtype=jnp.float32)   # NCHW
    params = init_params(kp, inp, oup, expand_ratio)

    fwd = jax.jit(functools.partial(
        inverted_residual_forward,
        inp=inp, oup=oup, stride=stride, expand_ratio=expand_ratio))

    out = fwd(x, params)
    jax.block_until_ready(out)
    assert out.shape == (2, oup, 16, 16), out.shape
    assert out.dtype == jnp.float32

    ref = jax.jit(functools.partial(
        _reference_forward,
        inp=inp, oup=oup, stride=stride, expand_ratio=expand_ratio))(x, params)
    max_err = float(jnp.max(jnp.abs(out - ref)))
    assert jnp.allclose(out, ref, atol=1e-2, rtol=1e-2), max_err

    print("KERNEL_OK")
</pallas_src>

<mosaic_0001>
module attributes {stable_mosaic.version = 11 : i64} {
  func.func @_fused_block_kernel(%arg0: i32, %arg1: i32, %arg2: memref<1x18x24x128xf32, #tpu.memory_space<vmem>>, %arg3: memref<128x128xf32, #tpu.memory_space<vmem>>, %arg4: memref<1x128xf32, #tpu.memory_space<vmem>>, %arg5: memref<3x3x128xf32, #tpu.memory_space<vmem>>, %arg6: memref<1x1x128xf32, #tpu.memory_space<vmem>>, %arg7: memref<128x128xf32, #tpu.memory_space<vmem>>, %arg8: memref<1x128xf32, #tpu.memory_space<vmem>>, %arg9: memref<1x16x16x128xf32, #tpu.memory_space<vmem>>, %arg10: memref<18x24x128xf32, #tpu.memory_space<vmem>>) attributes {dimension_semantics = [#tpu.dimension_semantics<parallel>, #tpu.dimension_semantics<parallel>], iteration_bounds = array<i64: 2, 1>, scalar_prefetch = 0 : i64, scratch_operands = 1 : i64, tpu.core_type = #tpu.core_type<tc>, window_params = [{transform_indices = @transform_0, window_bounds = array<i64: 1, 18, 24, 128>}, {pipeline_mode = #tpu.pipeline_mode<synchronous>, transform_indices = @transform_1, window_bounds = array<i64: 128, 128>}, {pipeline_mode = #tpu.pipeline_mode<synchronous>, transform_indices = @transform_2, window_bounds = array<i64: 1, 128>}, {pipeline_mode = #tpu.pipeline_mode<synchronous>, transform_indices = @transform_3, window_bounds = array<i64: 3, 3, 128>}, {pipeline_mode = #tpu.pipeline_mode<synchronous>, transform_indices = @transform_4, window_bounds = array<i64: 1, 1, 128>}, {pipeline_mode = #tpu.pipeline_mode<synchronous>, transform_indices = @transform_5, window_bounds = array<i64: 128, 128>}, {pipeline_mode = #tpu.pipeline_mode<synchronous>, transform_indices = @transform_6, window_bounds = array<i64: 1, 128>}, {transform_indices = @transform_7, window_bounds = array<i64: 1, 16, 16, 128>}]} {
    %c16_i32 = arith.constant 16 : i32
    %0 = arith.muli %arg1, %c16_i32 : i32
    %1 = tpu.assume_multiple %0, 16 : i32
    %c0 = arith.constant 0 : index
    %2 = arith.index_cast %1 : i32 to index
    %c0_0 = arith.constant 0 : index
    %c0_1 = arith.constant 0 : index
    %3 = vector.load %arg2[%c0, %2, %c0_0, %c0_1] : memref<1x18x24x128xf32, #tpu.memory_space<vmem>>, vector<1x18x24x128xf32>
    %4 = vector.shape_cast %3 : vector<1x18x24x128xf32> to vector<18x24x128xf32>
    %5 = vector.shape_cast %4 : vector<18x24x128xf32> to vector<432x128xf32>
    %c0_2 = arith.constant 0 : index
    %c0_3 = arith.constant 0 : index
    %6 = vector.load %arg3[%c0_2, %c0_3] : memref<128x128xf32, #tpu.memory_space<vmem>>, vector<128x128xf32>
    %cst = arith.constant dense<0.000000e+00> : vector<432x128xf32>
    %7 = tpu.matmul %5, %6, %cst {dimension_numbers = #tpu.dot_dimension_numbers<[1], [0], [0], [1], [0, 0, 1, 1], [], []>} : vector<432x128xf32>, vector<128x128xf32>, vector<432x128xf32> -> vector<432x128xf32>
    %c0_4 = arith.constant 0 : index
    %c0_5 = arith.constant 0 : index
    %8 = vector.load %arg4[%c0_4, %c0_5] : memref<1x128xf32, #tpu.memory_space<vmem>>, vector<1x128xf32>
    %9 = vector.broadcast %8 : vector<1x128xf32> to vector<432x128xf32>
    %10 = arith.addf %7, %9 : vector<432x128xf32>
    %cst_6 = arith.constant 0.000000e+00 : f32
    %cst_7 = arith.constant 6.000000e+00 : f32
    %11 = vector.broadcast %cst_6 : f32 to vector<432x128xf32>
    %12 = arith.maximumf %11, %10 : vector<432x128xf32>
    %13 = vector.broadcast %cst_7 : f32 to vector<432x128xf32>
    %14 = arith.minimumf %13, %12 : vector<432x128xf32>
    %15 = vector.shape_cast %14 : vector<432x128xf32> to vector<18x24x128xf32>
    %16 = tpu.iota {dimensions = array<i32: 0>} : vector<18x24x128xi32>
    %17 = vector.broadcast %1 : i32 to vector<18x24x128xi32>
    %18 = arith.addi %17, %16 : vector<18x24x128xi32>
    %19 = tpu.iota {dimensions = array<i32: 1>} : vector<18x24x128xi32>
    %c1_i32 = arith.constant 1 : i32
    %20 = vector.broadcast %c1_i32 : i32 to vector<18x24x128xi32>
    %21 = arith.cmpi sge, %18, %20 : vector<18x24x128xi32>
    %c16_i32_8 = arith.constant 16 : i32
    %22 = vector.broadcast %c16_i32_8 : i32 to vector<18x24x128xi32>
    %23 = arith.cmpi sle, %18, %22 : vector<18x24x128xi32>
    %24 = arith.andi %21, %23 : vector<18x24x128xi1>
    %c1_i32_9 = arith.constant 1 : i32
    %25 = vector.broadcast %c1_i32_9 : i32 to vector<18x24x128xi32>
    %26 = arith.cmpi sge, %19, %25 : vector<18x24x128xi32>
    %27 = arith.andi %24, %26 : vector<18x24x128xi1>
    %c16_i32_10 = arith.constant 16 : i32
    %28 = vector.broadcast %c16_i32_10 : i32 to vector<18x24x128xi32>
    %29 = arith.cmpi sle, %19, %28 : vector<18x24x128xi32>
    %30 = arith.andi %27, %29 : vector<18x24x128xi1>
    %cst_11 = arith.constant 0.000000e+00 : f32
    %31 = vector.broadcast %cst_11 : f32 to vector<18x24x128xf32>
    %32 = arith.select %30, %15, %31 : vector<18x24x128xi1>, vector<18x24x128xf32>
    %c0_12 = arith.constant 0 : index
    %c0_13 = arith.constant 0 : index
    %c0_14 = arith.constant 0 : index
    %33 = vector.load %arg10[%c0_12, %c0_13, %c0_14] : memref<18x24x128xf32, #tpu.memory_space<vmem>>, vector<18x24x128xf32>
    tpu.vector_store %arg10[%c0_12, %c0_13, %c0_14], %32 {strides = array<i32>} : memref<18x24x128xf32, #tpu.memory_space<vmem>>, vector<18x24x128xf32>,
    %c0_15 = arith.constant 0 : index
    %c0_16 = arith.constant 0 : index
    %c0_17 = arith.constant 0 : index
    %34 = vector.load %arg5[%c0_15, %c0_16, %c0_17] : memref<3x3x128xf32, #tpu.memory_space<vmem>>, vector<3x3x128xf32>
    %cst_18 = arith.constant 0.000000e+00 : f32
    %35 = vector.broadcast %cst_18 : f32 to vector<16x16x128xf32>
    %c0_19 = arith.constant 0 : index
    %c0_20 = arith.constant 0 : index
    %c0_21 = arith.constant 0 : index
    %36 = vector.load %arg10[%c0_19, %c0_20, %c0_21] : memref<18x24x128xf32, #tpu.memory_space<vmem>>, vector<16x16x128xf32>
    %37 = vector.extract_strided_slice %34 {offsets = [0, 0, 0], sizes = [1, 1, 128], strides = [1, 1, 1]} : vector<3x3x128xf32> to vector<1x1x128xf32>
    %38 = vector.broadcast %37 : vector<1x1x128xf32> to vector<16x16x128xf32>
    %39 = arith.mulf %36, %38 : vector<16x16x128xf32>
    %40 = arith.addf %35, %39 : vector<16x16x128xf32>
    %c0_22 = arith.constant 0 : index
    %c1 = arith.constant 1 : index
    %c0_23 = arith.constant 0 : index
    %41 = vector.load %arg10[%c0_22, %c1, %c0_23] : memref<18x24x128xf32, #tpu.memory_space<vmem>>, vector<16x16x128xf32>
    %42 = vector.extract_strided_slice %34 {offsets = [0, 1, 0], sizes = [1, 1, 128], strides = [1, 1, 1]} : vector<3x3x128xf32> to vector<1x1x128xf32>
    %43 = vector.broadcast %42 : vector<1x1x128xf32> to vector<16x16x128xf32>
    %44 = arith.mulf %41, %43 : vector<16x16x128xf32>
    %45 = arith.addf %40, %44 : vector<16x16x128xf32>
    %c0_24 = arith.constant 0 : index
    %c2 = arith.constant 2 : index
    %c0_25 = arith.constant 0 : index
    %46 = vector.load %arg10[%c0_24, %c2, %c0_25] : memref<18x24x128xf32, #tpu.memory_space<vmem>>, vector<16x16x128xf32>
    %47 = vector.extract_strided_slice %34 {offsets = [0, 2, 0], sizes = [1, 1, 128], strides = [1, 1, 1]} : vector<3x3x128xf32> to vector<1x1x128xf32>
    %48 = vector.broadcast %47 : vector<1x1x128xf32> to vector<16x16x128xf32>
    %49 = arith.mulf %46, %48 : vector<16x16x128xf32>
    %50 = arith.addf %45, %49 : vector<16x16x128xf32>
    %c1_26 = arith.constant 1 : index
    %c0_27 = arith.constant 0 : index
    %c0_28 = arith.constant 0 : index
    %51 = vector.load %arg10[%c1_26, %c0_27, %c0_28] : memref<18x24x128xf32, #tpu.memory_space<vmem>>, vector<16x16x128xf32>
    %52 = vector.extract_strided_slice %34 {offsets = [1, 0, 0], sizes = [1, 1, 128], strides = [1, 1, 1]} : vector<3x3x128xf32> to vector<1x1x128xf32>
    %53 = vector.broadcast %52 : vector<1x1x128xf32> to vector<16x16x128xf32>
    %54 = arith.mulf %51, %53 : vector<16x16x128xf32>
    %55 = arith.addf %50, %54 : vector<16x16x128xf32>
    %c1_29 = arith.constant 1 : index
    %c1_30 = arith.constant 1 : index
    %c0_31 = arith.constant 0 : index
    %56 = vector.load %arg10[%c1_29, %c1_30, %c0_31] : memref<18x24x128xf32, #tpu.memory_space<vmem>>, vector<16x16x128xf32>
    %57 = vector.extract_strided_slice %34 {offsets = [1, 1, 0], sizes = [1, 1, 128], strides = [1, 1, 1]} : vector<3x3x128xf32> to vector<1x1x128xf32>
    %58 = vector.broadcast %57 : vector<1x1x128xf32> to vector<16x16x128xf32>
    %59 = arith.mulf %56, %58 : vector<16x16x128xf32>
    %60 = arith.addf %55, %59 : vector<16x16x128xf32>
    %c1_32 = arith.constant 1 : index
    %c2_33 = arith.constant 2 : index
    %c0_34 = arith.constant 0 : index
    %61 = vector.load %arg10[%c1_32, %c2_33, %c0_34] : memref<18x24x128xf32, #tpu.memory_space<vmem>>, vector<16x16x128xf32>
    %62 = vector.extract_strided_slice %34 {offsets = [1, 2, 0], sizes = [1, 1, 128], strides = [1, 1, 1]} : vector<3x3x128xf32> to vector<1x1x128xf32>
    %63 = vector.broadcast %62 : vector<1x1x128xf32> to vector<16x16x128xf32>
    %64 = arith.mulf %61, %63 : vector<16x16x128xf32>
    %65 = arith.addf %60, %64 : vector<16x16x128xf32>
    %c2_35 = arith.constant 2 : index
    %c0_36 = arith.constant 0 : index
    %c0_37 = arith.constant 0 : index
    %66 = vector.load %arg10[%c2_35, %c0_36, %c0_37] : memref<18x24x128xf32, #tpu.memory_space<vmem>>, vector<16x16x128xf32>
    %67 = vector.extract_strided_slice %34 {offsets = [2, 0, 0], sizes = [1, 1, 128], strides = [1, 1, 1]} : vector<3x3x128xf32> to vector<1x1x128xf32>
    %68 = vector.broadcast %67 : vector<1x1x128xf32> to vector<16x16x128xf32>
    %69 = arith.mulf %66, %68 : vector<16x16x128xf32>
    %70 = arith.addf %65, %69 : vector<16x16x128xf32>
    %c2_38 = arith.constant 2 : index
    %c1_39 = arith.constant 1 : index
    %c0_40 = arith.constant 0 : index
    %71 = vector.load %arg10[%c2_38, %c1_39, %c0_40] : memref<18x24x128xf32, #tpu.memory_space<vmem>>, vector<16x16x128xf32>
    %72 = vector.extract_strided_slice %34 {offsets = [2, 1, 0], sizes = [1, 1, 128], strides = [1, 1, 1]} : vector<3x3x128xf32> to vector<1x1x128xf32>
    %73 = vector.broadcast %72 : vector<1x1x128xf32> to vector<16x16x128xf32>
    %74 = arith.mulf %71, %73 : vector<16x16x128xf32>
    %75 = arith.addf %70, %74 : vector<16x16x128xf32>
    %c2_41 = arith.constant 2 : index
    %c2_42 = arith.constant 2 : index
    %c0_43 = arith.constant 0 : index
    %76 = vector.load %arg10[%c2_41, %c2_42, %c0_43] : memref<18x24x128xf32, #tpu.memory_space<vmem>>, vector<16x16x128xf32>
    %77 = vector.extract_strided_slice %34 {offsets = [2, 2, 0], sizes = [1, 1, 128], strides = [1, 1, 1]} : vector<3x3x128xf32> to vector<1x1x128xf32>
    %78 = vector.broadcast %77 : vector<1x1x128xf32> to vector<16x16x128xf32>
    %79 = arith.mulf %76, %78 : vector<16x16x128xf32>
    %80 = arith.addf %75, %79 : vector<16x16x128xf32>
    %c0_44 = arith.constant 0 : index
    %c0_45 = arith.constant 0 : index
    %c0_46 = arith.constant 0 : index
    %81 = vector.load %arg6[%c0_44, %c0_45, %c0_46] : memref<1x1x128xf32, #tpu.memory_space<vmem>>, vector<1x1x128xf32>
    %82 = vector.broadcast %81 : vector<1x1x128xf32> to vector<16x16x128xf32>
    %83 = arith.addf %80, %82 : vector<16x16x128xf32>
    %cst_47 = arith.constant 0.000000e+00 : f32
    %cst_48 = arith.constant 6.000000e+00 : f32
    %84 = vector.broadcast %cst_47 : f32 to vector<16x16x128xf32>
    %85 = arith.maximumf %84, %83 : vector<16x16x128xf32>
    %86 = vector.broadcast %cst_48 : f32 to vector<16x16x128xf32>
    %87 = arith.minimumf %86, %85 : vector<16x16x128xf32>
    %88 = vector.shape_cast %87 : vector<16x16x128xf32> to vector<256x128xf32>
    %c0_49 = arith.constant 0 : index
    %c0_50 = arith.constant 0 : index
    %89 = vector.load %arg7[%c0_49, %c0_50] : memref<128x128xf32, #tpu.memory_space<vmem>>, vector<128x128xf32>
    %cst_51 = arith.constant dense<0.000000e+00> : vector<256x128xf32>
    %90 = tpu.matmul %88, %89, %cst_51 {dimension_numbers = #tpu.dot_dimension_numbers<[1], [0], [0], [1], [0, 0, 1, 1], [], []>} : vector<256x128xf32>, vector<128x128xf32>, vector<256x128xf32> -> vector<256x128xf32>
    %c0_52 = arith.constant 0 : index
    %c0_53 = arith.constant 0 : index
    %91 = vector.load %arg8[%c0_52, %c0_53] : memref<1x128xf32, #tpu.memory_space<vmem>>, vector<1x128xf32>
    %92 = vector.broadcast %91 : vector<1x128xf32> to vector<256x128xf32>
    %93 = arith.addf %90, %92 : vector<256x128xf32>
    %c1_i32_54 = arith.constant 1 : i32
    %94 = arith.addi %1, %c1_i32_54 : i32
    %c0_55 = arith.constant 0 : index
    %95 = arith.index_cast %94 : i32 to index
    %c1_56 = arith.constant 1 : index
    %c0_57 = arith.constant 0 : index
    %96 = vector.load %arg2[%c0_55, %95, %c1_56, %c0_57] : memref<1x18x24x128xf32, #tpu.memory_space<vmem>>, vector<1x16x16x128xf32>
    %97 = vector.shape_cast %96 : vector<1x16x16x128xf32> to vector<16x16x128xf32>
    %98 = vector.shape_cast %97 : vector<16x16x128xf32> to vector<256x128xf32>
    %99 = arith.addf %93, %98 : vector<256x128xf32>
    %100 = vector.shape_cast %99 : vector<256x128xf32> to vector<16x16x128xf32>
    %c0_58 = arith.constant 0 : index
    %c0_59 = arith.constant 0 : index
    %c0_60 = arith.constant 0 : index
    %c0_61 = arith.constant 0 : index
    %101 = vector.load %arg9[%c0_58, %c0_59, %c0_60, %c0_61] : memref<1x16x16x128xf32, #tpu.memory_space<vmem>>, vector<1x16x16x128xf32>
    %102 = vector.shape_cast %101 : vector<1x16x16x128xf32> to vector<16x16x128xf32>
    %103 = vector.shape_cast %100 : vector<16x16x128xf32> to vector<1x16x16x128xf32>
    tpu.vector_store %arg9[%c0_58, %c0_59, %c0_60, %c0_61], %103 {strides = array<i32>} : memref<1x16x16x128xf32, #tpu.memory_space<vmem>>, vector<1x16x16x128xf32>,
    return
  }
  func.func @transform_0(%arg0: i32, %arg1: i32) -> (i32, i32, i32, i32) {
    %c0_i32 = arith.constant 0 : i32
    %c0_i32_0 = arith.constant 0 : i32
    %c0_i32_1 = arith.constant 0 : i32
    %c0_i32_2 = arith.constant 0 : i32
    return %arg0, %c0_i32, %c0_i32_0, %c0_i32_1 : i32, i32, i32, i32
  }
  func.func @transform_1(%arg0: i32, %arg1: i32) -> (i32, i32) {
    %c0_i32 = arith.constant 0 : i32
    %c0_i32_0 = arith.constant 0 : i32
    %c0_i32_1 = arith.constant 0 : i32
    return %c0_i32, %c0_i32_0 : i32, i32
  }
  func.func @transform_2(%arg0: i32, %arg1: i32) -> (i32, i32) {
    %c0_i32 = arith.constant 0 : i32
    %c0_i32_0 = arith.constant 0 : i32
    %c0_i32_1 = arith.constant 0 : i32
    return %c0_i32, %c0_i32_0 : i32, i32
  }
  func.func @transform_3(%arg0: i32, %arg1: i32) -> (i32, i32, i32) {
    %c0_i32 = arith.constant 0 : i32
    %c0_i32_0 = arith.constant 0 : i32
    %c0_i32_1 = arith.constant 0 : i32
    %c0_i32_2 = arith.constant 0 : i32
    return %c0_i32, %c0_i32_0, %c0_i32_1 : i32, i32, i32
  }
  func.func @transform_4(%arg0: i32, %arg1: i32) -> (i32, i32, i32) {
    %c0_i32 = arith.constant 0 : i32
    %c0_i32_0 = arith.constant 0 : i32
    %c0_i32_1 = arith.constant 0 : i32
    %c0_i32_2 = arith.constant 0 : i32
    return %c0_i32, %c0_i32_0, %c0_i32_1 : i32, i32, i32
  }
  func.func @transform_5(%arg0: i32, %arg1: i32) -> (i32, i32) {
    %c0_i32 = arith.constant 0 : i32
    %c0_i32_0 = arith.constant 0 : i32
    %c0_i32_1 = arith.constant 0 : i32
    return %c0_i32, %c0_i32_0 : i32, i32
  }
  func.func @transform_6(%arg0: i32, %arg1: i32) -> (i32, i32) {
    %c0_i32 = arith.constant 0 : i32
    %c0_i32_0 = arith.constant 0 : i32
    %c0_i32_1 = arith.constant 0 : i32
    return %c0_i32, %c0_i32_0 : i32, i32
  }
  func.func @transform_7(%arg0: i32, %arg1: i32) -> (i32, i32, i32, i32) {
    %c0_i32 = arith.constant 0 : i32
    %c0_i32_0 = arith.constant 0 : i32
    %c0_i32_1 = arith.constant 0 : i32
    return %arg0, %arg1, %c0_i32, %c0_i32_0 : i32, i32, i32, i32
  }
}

</mosaic_0001>

<llo_original>
// kernel: inverted_residual_forward.1
$region0: #{inverted_residual_forward.1}
  #allocation0 [shape = 'u32[]', space=smem, size = 0x4, offset = 0x4, fixed_abs, tag = 'smem constant byte address 0x4 - core index']
  #allocation1 [shape = 'u32[144,128]{1,0:T(1,128)}', space=vmem, size = 0x12000, scoped, tag = 'internal scratch']
  #allocation2 [shape = 'f32[18,24,128]{2,1,0:T(8,128)}', space=vmem, size = 0x36000, scoped, tag = 'scratch operand']
  %s0 = inlined_call_operand.vmem [shape: f32[2,18,24,128], index: 0, kind: input, shape index: {}]
  %s1 = inlined_call_operand.vmem [shape: f32[128,128], index: 1, kind: input, shape index: {}]
  %s2 = inlined_call_operand.vmem [shape: f32[1,128], index: 2, kind: input, shape index: {}]
  %s3 = inlined_call_operand.vmem [shape: f32[3,3,128], index: 3, kind: input, shape index: {}]
  %s4 = inlined_call_operand.vmem [shape: f32[1,1,128], index: 4, kind: input, shape index: {}]
  %s5 = inlined_call_operand.vmem [shape: f32[128,128], index: 5, kind: input, shape index: {}]
  %s6 = inlined_call_operand.vmem [shape: f32[1,128], index: 6, kind: input, shape index: {}]
  %s7 = inlined_call_operand.vmem [shape: f32[2,16,16,128], index: 7, kind: output, shape index: {}]
  %s8 = sld [smem:[#allocation0]]
  $region61: #{inverted_residual_forward.1} parent=0
    _
  %s10 = ssub.s32 1, %s8
  %s11 = scalar_select 0, %s10, %s8
  loop: start=0, step=1, limit=4
  $region2: #{inverted_residual_forward.1} parent=0 // loop_pre_header
    _
  $region3: #{inverted_residual_forward.1} parent=0 // loop_header
    %s13 = sphi 0, %s17
    %p14 = scmp.ge.s32.totalorder %s13, 4
    %s20 = sphi 0, %s32
    %s21 = sphi 0, %s28
    %s22 = sphi 0, %s20
    %s23 = sphi 0, %s21
    %s24 = sphi 0, %s22
    %s25 = sphi 0, %s23
    %s35 = sphi 0, %s37
    %s38 = sphi 0, %s35
    %s39 = sphi 0, %s38
    %s55 = sphi 0, %s39
    %s59 = sphi 0, %s59
    %s61 = sphi 0, %s59
    %s62 = sphi 0, %s61
    %s76 = sphi 0, %s62
    %s80 = sphi 0, %s80
    %s82 = sphi 0, %s80
    %s83 = sphi 0, %s82
    %s97 = sphi 0, %s83
    %s101 = sphi 0, %s101
    %s103 = sphi 0, %s101
    %s104 = sphi 0, %s103
    %s118 = sphi 0, %s104
    %s122 = sphi 0, %s122
    %s124 = sphi 0, %s122
    %s125 = sphi 0, %s124
    %s139 = sphi 0, %s125
    %s143 = sphi 0, %s143
    %s145 = sphi 0, %s143
    %s146 = sphi 0, %s145
    %s160 = sphi 0, %s146
    %s164 = sphi 0, %s164
    %s166 = sphi 0, %s164
    %s167 = sphi 0, %s166
    %s181 = sphi 0, %s167
    %s189 = sphi 0, %s191
    %s192 = sphi 0, %s189
    %s193 = sphi 0, %s192
    %s209 = sphi 0, %s193
  $region4: #{inverted_residual_forward.1} parent=0 // loop_header_branch
    %16 = sbr.rel (%p14) target = $region8
  $region5: #{inverted_residual_forward.1} parent=0 // loop_body
    %s18 = ssub.s32 %s13, 1
    %s19 = ssub.s32 %s13, 2
    %s26 = sadd.s32 1, %s21
    %p27 = scmp.ge.s32.totalorder %s26, 1
    %s28 = scalar_select %p27, 0, %s26
    %s29 = sadd.s32 1, %s20
    %s30 = scalar_select %p27, %s29, %s20
    %p31 = scmp.ge.s32.totalorder %s30, 2
    %s32 = scalar_select %p31, 0, %s30
    %s33 = ssub.s32 %s20, %s32
    %p34 = scmp.eq.s32.totalorder %s33, 0
    %s36 = sadd.s32 %s35, 1
    %s37 = scalar_select %p34, %s35, %s36
    %p40 = pneg %p34
    %p41 = scmp.eq.s32.totalorder %s13, 1
    %p42 = por %p40, %p41
    %p43 = scmp.ne.s32.totalorder %s35, %s38
    %p44 = scmp.eq.s32.totalorder %s13, 0
    %p45 = por %p43, %p44
    %p46 = scmp.ne.s32.totalorder %s35, %s38
    %p47 = scmp.eq.s32.totalorder %s18, 1
    %p48 = por %p46, %p47
    %p49 = scmp.ne.s32.totalorder %s38, %s39
    %p50 = scmp.eq.s32.totalorder %s18, 0
    %p51 = por %p49, %p50
    %p52 = scmp.ne.s32.totalorder %s38, %s39
    %p53 = scmp.eq.s32.totalorder %s19, 1
    %p54 = por %p52, %p53
    %p56 = scmp.ne.s32.totalorder %s39, %s55
    %p57 = scmp.eq.s32.totalorder %s19, 0
    %p58 = por %p56, %p57
    %s60 = sadd.s32 %s59, 1
    %p63 = scmp.eq.s32.totalorder %s13, 1
    %p64 = scmp.ne.s32.totalorder %s59, %s61
    %p65 = scmp.eq.s32.totalorder %s13, 0
    %p66 = por %p64, %p65
    %p67 = scmp.ne.s32.totalorder %s59, %s61
    %p68 = scmp.eq.s32.totalorder %s18, 1
    %p69 = por %p67, %p68
    %p70 = scmp.ne.s32.totalorder %s61, %s62
    %p71 = scmp.eq.s32.totalorder %s18, 0
    %p72 = por %p70, %p71
    %p73 = scmp.ne.s32.totalorder %s61, %s62
    %p74 = scmp.eq.s32.totalorder %s19, 1
    %p75 = por %p73, %p74
    %p77 = scmp.ne.s32.totalorder %s62, %s76
    %p78 = scmp.eq.s32.totalorder %s19, 0
    %p79 = por %p77, %p78
    %s81 = sadd.s32 %s80, 1
    %p84 = scmp.eq.s32.totalorder %s13, 1
    %p85 = scmp.ne.s32.totalorder %s80, %s82
    %p86 = scmp.eq.s32.totalorder %s13, 0
    %p87 = por %p85, %p86
    %p88 = scmp.ne.s32.totalorder %s80, %s82
    %p89 = scmp.eq.s32.totalorder %s18, 1
    %p90 = por %p88, %p89
    %p91 = scmp.ne.s32.totalorder %s82, %s83
    %p92 = scmp.eq.s32.totalorder %s18, 0
    %p93 = por %p91, %p92
    %p94 = scmp.ne.s32.totalorder %s82, %s83
    %p95 = scmp.eq.s32.totalorder %s19, 1
    %p96 = por %p94, %p95
    %p98 = scmp.ne.s32.totalorder %s83, %s97
    %p99 = scmp.eq.s32.totalorder %s19, 0
    %p100 = por %p98, %p99
    %s102 = sadd.s32 %s101, 1
    %p105 = scmp.eq.s32.totalorder %s13, 1
    %p106 = scmp.ne.s32.totalorder %s101, %s103
    %p107 = scmp.eq.s32.totalorder %s13, 0
    %p108 = por %p106, %p107
    %p109 = scmp.ne.s32.totalorder %s101, %s103
    %p110 = scmp.eq.s32.totalorder %s18, 1
    %p111 = por %p109, %p110
    %p112 = scmp.ne.s32.totalorder %s103, %s104
    %p113 = scmp.eq.s32.totalorder %s18, 0
    %p114 = por %p112, %p113
    %p115 = scmp.ne.s32.totalorder %s103, %s104
    %p116 = scmp.eq.s32.totalorder %s19, 1
    %p117 = por %p115, %p116
    %p119 = scmp.ne.s32.totalorder %s104, %s118
    %p120 = scmp.eq.s32.totalorder %s19, 0
    %p121 = por %p119, %p120
    %s123 = sadd.s32 %s122, 1
    %p126 = scmp.eq.s32.totalorder %s13, 1
    %p127 = scmp.ne.s32.totalorder %s122, %s124
    %p128 = scmp.eq.s32.totalorder %s13, 0
    %p129 = por %p127, %p128
    %p130 = scmp.ne.s32.totalorder %s122, %s124
    %p131 = scmp.eq.s32.totalorder %s18, 1
    %p132 = por %p130, %p131
    %p133 = scmp.ne.s32.totalorder %s124, %s125
    %p134 = scmp.eq.s32.totalorder %s18, 0
    %p135 = por %p133, %p134
    %p136 = scmp.ne.s32.totalorder %s124, %s125
    %p137 = scmp.eq.s32.totalorder %s19, 1
    %p138 = por %p136, %p137
    %p140 = scmp.ne.s32.totalorder %s125, %s139
    %p141 = scmp.eq.s32.totalorder %s19, 0
    %p142 = por %p140, %p141
    %s144 = sadd.s32 %s143, 1
    %p147 = scmp.eq.s32.totalorder %s13, 1
    %p148 = scmp.ne.s32.totalorder %s143, %s145
    %p149 = scmp.eq.s32.totalorder %s13, 0
    %p150 = por %p148, %p149
    %p151 = scmp.ne.s32.totalorder %s143, %s145
    %p152 = scmp.eq.s32.totalorder %s18, 1
    %p153 = por %p151, %p152
    %p154 = scmp.ne.s32.totalorder %s145, %s146
    %p155 = scmp.eq.s32.totalorder %s18, 0
    %p156 = por %p154, %p155
    %p157 = scmp.ne.s32.totalorder %s145, %s146
    %p158 = scmp.eq.s32.totalorder %s19, 1
    %p159 = por %p157, %p158
    %p161 = scmp.ne.s32.totalorder %s146, %s160
    %p162 = scmp.eq.s32.totalorder %s19, 0
    %p163 = por %p161, %p162
    %s165 = sadd.s32 %s164, 1
    %p168 = scmp.eq.s32.totalorder %s13, 1
    %p169 = scmp.ne.s32.totalorder %s164, %s166
    %p170 = scmp.eq.s32.totalorder %s13, 0
    %p171 = por %p169, %p170
    %p172 = scmp.ne.s32.totalorder %s164, %s166
    %p173 = scmp.eq.s32.totalorder %s18, 1
    %p174 = por %p172, %p173
    %p175 = scmp.ne.s32.totalorder %s166, %s167
    %p176 = scmp.eq.s32.totalorder %s18, 0
    %p177 = por %p175, %p176
    %p178 = scmp.ne.s32.totalorder %s166, %s167
    %p179 = scmp.eq.s32.totalorder %s19, 1
    %p180 = por %p178, %p179
    %p182 = scmp.ne.s32.totalorder %s167, %s181
    %p183 = scmp.eq.s32.totalorder %s19, 0
    %p184 = por %p182, %p183
    %s185 = ssub.s32 %s20, %s32
    %s186 = ssub.s32 %s21, %s28
    %s187 = sor.u32 %s185, %s186
    %p188 = scmp.eq.s32.totalorder %s187, 0
    %s190 = sadd.s32 %s189, 1
    %s191 = scalar_select %p188, %s189, %s190
    %p194 = pneg %p188
    %p195 = scmp.eq.s32.totalorder %s13, 1
    %p196 = por %p194, %p195
    %p197 = scmp.ne.s32.totalorder %s189, %s192
    %p198 = scmp.eq.s32.totalorder %s13, 0
    %p199 = por %p197, %p198
    %p200 = scmp.ne.s32.totalorder %s189, %s192
    %p201 = scmp.eq.s32.totalorder %s18, 1
    %p202 = por %p200, %p201
    %p203 = scmp.ne.s32.totalorder %s192, %s193
    %p204 = scmp.eq.s32.totalorder %s18, 0
    %p205 = por %p203, %p204
    %p206 = scmp.ne.s32.totalorder %s192, %s193
    %p207 = scmp.eq.s32.totalorder %s19, 1
    %p208 = por %p206, %p207
    %p210 = scmp.ne.s32.totalorder %s193, %s209
    %p211 = scmp.eq.s32.totalorder %s19, 0
    %p212 = por %p210, %p211
    %p213 = scmp.le.s32.totalorder 1, %s13
    %p214 = scmp.lt.s32.totalorder %s13, 3
    %p215 = pnand %p213, %p214
    %p216 = pneg %p215
    // Predicated region
    $region9: #{inverted_residual_forward.1} parent=5 // pred_check
      _
    $region10: #{inverted_residual_forward.1} parent=5 // pred_check_branch
      %218 = sbr.rel (%p215) target = $region12
    $region11: #{inverted_residual_forward.1} parent=5 // pred_region
      %s219 = ssub.s32 %s13, 1
      // Predicated region
      $region13: #{inverted_residual_forward.1} parent=11 // pred_check
        %p220 = pneg %p72
      $region14: #{inverted_residual_forward.1} parent=11 // pred_check_branch
        %222 = sbr.rel (%p220) target = $region16
      $region15: #{inverted_residual_forward.1} parent=11 // pred_region
        _
      $region16: #{inverted_residual_forward.1} parent=11 // pred_fallthru
        _
      // Predicated region
      $region17: #{inverted_residual_forward.1} parent=11 // pred_check
        %p223 = pneg %p93
      $region18: #{inverted_residual_forward.1} parent=11 // pred_check_branch
        %225 = sbr.rel (%p223) target = $region20
      $region19: #{inverted_residual_forward.1} parent=11 // pred_region
        _
      $region20: #{inverted_residual_forward.1} parent=11 // pred_fallthru
        _
      // Predicated region
      $region21: #{inverted_residual_forward.1} parent=11 // pred_check
        %p226 = pneg %p114
      $region22: #{inverted_residual_forward.1} parent=11 // pred_check_branch
        %228 = sbr.rel (%p226) target = $region24
      $region23: #{inverted_residual_forward.1} parent=11 // pred_region
        _
      $region24: #{inverted_residual_forward.1} parent=11 // pred_fallthru
        _
      // Predicated region
      $region25: #{inverted_residual_forward.1} parent=11 // pred_check
        %p229 = pneg %p135
      $region26: #{inverted_residual_forward.1} parent=11 // pred_check_branch
        %231 = sbr.rel (%p229) target = $region28
      $region27: #{inverted_residual_forward.1} parent=11 // pred_region
        _
      $region28: #{inverted_residual_forward.1} parent=11 // pred_fallthru
        _
      // Predicated region
      $region29: #{inverted_residual_forward.1} parent=11 // pred_check
        %p232 = pneg %p156
      $region30: #{inverted_residual_forward.1} parent=11 // pred_check_branch
        %234 = sbr.rel (%p232) target = $region32
      $region31: #{inverted_residual_forward.1} parent=11 // pred_region
        _
      $region32: #{inverted_residual_forward.1} parent=11 // pred_fallthru
        _
      // Predicated region
      $region33: #{inverted_residual_forward.1} parent=11 // pred_check
        %p235 = pneg %p177
      $region34: #{inverted_residual_forward.1} parent=11 // pred_check_branch
        %237 = sbr.rel (%p235) target = $region36
      $region35: #{inverted_residual_forward.1} parent=11 // pred_region
        _
      $region36: #{inverted_residual_forward.1} parent=11 // pred_fallthru
        _
    $region12: #{inverted_residual_forward.1} parent=5 // pred_fallthru
      _
    %p238 = scmp.lt.s32.totalorder %s13, 2
    // Predicated region
    $region37: #{inverted_residual_forward.1} parent=5 // pred_check
      %p239 = pneg %p238
    $region38: #{inverted_residual_forward.1} parent=5 // pred_check_branch
      %241 = sbr.rel (%p239) target = $region40
    $region39: #{inverted_residual_forward.1} parent=5 // pred_region
      // Predicated region
      $region41: #{inverted_residual_forward.1} parent=39 // pred_check
        %p242 = pneg %p45
      $region42: #{inverted_residual_forward.1} parent=39 // pred_check_branch
        %244 = sbr.rel (%p242) target = $region44
      $region43: #{inverted_residual_forward.1} parent=39 // pred_region
        %p245 = scmp.lt.s32.totalorder %s20, 1
        %s246 = scalar_select %p245, %s20, 1
        %s247 = smul.addr %s246, 54
        %s248 = smul.addr %s247, 8
        %s249 = scalar_lea.vmem %s0, %s248
      $region44: #{inverted_residual_forward.1} parent=39 // pred_fallthru
        _
    $region40: #{inverted_residual_forward.1} parent=5 // pred_fallthru
      _
    %p250 = scmp.le.s32.totalorder 1, %s13
    %p251 = scmp.lt.s32.totalorder %s13, 3
    %p252 = pnand %p250, %p251
    %p253 = pneg %p252
    // Predicated region
    $region45: #{inverted_residual_forward.1} parent=5 // pred_check
      _
    $region46: #{inverted_residual_forward.1} parent=5 // pred_check_branch
      %255 = sbr.rel (%p252) target = $region48
    $region47: #{inverted_residual_forward.1} parent=5 // pred_region
      %s256 = ssub.s32 %s13, 1
      %p257 = scmp.lt.s32.totalorder %s22, 1
      %s258 = scalar_select %p257, %s22, 1
      %s259 = smul.addr %s258, 54
      %s260 = smul.addr %s259, 8
      %s261 = scalar_lea.vmem %s0, %s260
      %p262 = pneg %p51
      %p263 = pneg %p48
      %p264 = pneg %p72
      %p265 = pneg %p69
      %p266 = pneg %p93
      %p267 = pneg %p90
      %p268 = pneg %p114
      %p269 = pneg %p111
      %p270 = pneg %p135
      %p271 = pneg %p132
      %p272 = pneg %p156
      %p273 = pneg %p153
      %p274 = pneg %p177
      %p275 = pneg %p174
      %p276 = pneg %p205
      %p277 = pneg %p202
      %s278 = smul.u32 16, %s23
      %p279 = scmp.lt.s32.totalorder %s22, 1
      %s280 = scalar_select %p279, %s22, 1
      %p281 = scmp.lt.s32.totalorder %s278, 15
      %s282 = scalar_select %p281, %s278, 15
      %s283 = smul.addr %s282, 2
      %s284 = smul.addr %s280, 32
      %s285 = sadd.s32 %s283, %s284
      %s286 = smul.addr %s285, 8
      %s287 = scalar_lea.vmem %s7, %s286
      %p288 = scmp.lt.s32.totalorder %s22, 1
      %s289 = scalar_select %p288, %s22, 1
      %s290 = smul.addr %s289, 54
      %s291 = smul.addr %s290, 8
      %s292 = scalar_lea.vmem %s0, %s291
      %s293 = smul.u32 16, %s23
      %p294 = scmp.lt.s32.totalorder %s22, 1
      %s295 = scalar_select %p294, %s22, 1
      %p296 = scmp.lt.s32.totalorder %s293, 15
      %s297 = scalar_select %p296, %s293, 15
      %s298 = smul.addr %s297, 2
      %s299 = smul.addr %s295, 32
      %s300 = sadd.s32 %s298, %s299
      %s301 = smul.addr %s300, 8
      %s302 = scalar_lea.vmem %s7, %s301
      %s303 = smul.u32 16, %s23
      %s304 = smul.u32 %s23, 16
      %s305 = smul.u32 %s304, 24
      %s306 = scalar_lea.vmem %s292, %s305
      %v307 = vld [vmem:[%s306] sm:$0xff]
      %v308 = vld [vmem:[%s306 + $0x8] sm:$0xff]
      %v309 = vld [vmem:[%s306 + $0x10] sm:$0xff]
      %v310 = vld [vmem:[%s306 + $0x18] sm:$0xff]
      %v311 = vld [vmem:[%s306 + $0x20] sm:$0xff]
      %v312 = vld [vmem:[%s306 + $0x28] sm:$0xff]
      %v313 = vld [vmem:[%s306 + $0x30] sm:$0xff]
      %v314 = vld [vmem:[%s306 + $0x38] sm:$0xff]
      %v315 = vld [vmem:[%s306 + $0x40] sm:$0xff]
      %v316 = vld [vmem:[%s306 + $0x48] sm:$0xff]
      %v317 = vld [vmem:[%s306 + $0x50] sm:$0xff]
      %v318 = vld [vmem:[%s306 + $0x58] sm:$0xff]
      %v319 = vld [vmem:[%s306 + $0x60] sm:$0xff]
      %v320 = vld [vmem:[%s306 + $0x68] sm:$0xff]
      %v321 = vld [vmem:[%s306 + $0x70] sm:$0xff]
      %v322 = vld [vmem:[%s306 + $0x78] sm:$0xff]
      %v323 = vld [vmem:[%s306 + $0x80] sm:$0xff]
      %v324 = vld [vmem:[%s306 + $0x88] sm:$0xff]
      %v325 = vld [vmem:[%s306 + $0x90] sm:$0xff]
      %v326 = vld [vmem:[%s306 + $0x98] sm:$0xff]
      %v327 = vld [vmem:[%s306 + $0xa0] sm:$0xff]
      %v328 = vld [vmem:[%s306 + $0xa8] sm:$0xff]
      %v329 = vld [vmem:[%s306 + $0xb0] sm:$0xff]
      %v330 = vld [vmem:[%s306 + $0xb8] sm:$0xff]
      %v331 = vld [vmem:[%s306 + $0xc0] sm:$0xff]
      %v332 = vld [vmem:[%s306 + $0xc8] sm:$0xff]
      %v333 = vld [vmem:[%s306 + $0xd0] sm:$0xff]
      %v334 = vld [vmem:[%s306 + $0xd8] sm:$0xff]
      %v335 = vld [vmem:[%s306 + $0xe0] sm:$0xff]
      %v336 = vld [vmem:[%s306 + $0xe8] sm:$0xff]
      %v337 = vld [vmem:[%s306 + $0xf0] sm:$0xff]
      %v338 = vld [vmem:[%s306 + $0xf8] sm:$0xff]
      %v339 = vld [vmem:[%s306 + $0x100] sm:$0xff]
      %v340 = vld [vmem:[%s306 + $0x108] sm:$0xff]
      %v341 = vld [vmem:[%s306 + $0x110] sm:$0xff]
      %v342 = vld [vmem:[%s306 + $0x118] sm:$0xff]
      %v343 = vld [vmem:[%s306 + $0x120] sm:$0xff]
      %v344 = vld [vmem:[%s306 + $0x128] sm:$0xff]
      %v345 = vld [vmem:[%s306 + $0x130] sm:$0xff]
      %v346 = vld [vmem:[%s306 + $0x138] sm:$0xff]
      %v347 = vld [vmem:[%s306 + $0x140] sm:$0xff]
      %v348 = vld [vmem:[%s306 + $0x148] sm:$0xff]
      %v349 = vld [vmem:[%s306 + $0x150] sm:$0xff]
      %v350 = vld [vmem:[%s306 + $0x158] sm:$0xff]
      %v351 = vld [vmem:[%s306 + $0x160] sm:$0xff]
      %v352 = vld [vmem:[%s306 + $0x168] sm:$0xff]
      %v353 = vld [vmem:[%s306 + $0x170] sm:$0xff]
      %v354 = vld [vmem:[%s306 + $0x178] sm:$0xff]
      %v355 = vld [vmem:[%s306 + $0x180] sm:$0xff]
      %v356 = vld [vmem:[%s306 + $0x188] sm:$0xff]
      %v357 = vld [vmem:[%s306 + $0x190] sm:$0xff]
      %v358 = vld [vmem:[%s306 + $0x198] sm:$0xff]
      %v359 = vld [vmem:[%s306 + $0x1a0] sm:$0xff]
      %v360 = vld [vmem:[%s306 + $0x1a8] sm:$0xff]
      %v361 = vld [vmem:[%s1] sm:$0xff]
      %v362 = vld [vmem:[%s1 + $0x8] sm:$0xff]
      %v363 = vld [vmem:[%s1 + $0x10] sm:$0xff]
      %v364 = vld [vmem:[%s1 + $0x18] sm:$0xff]
      %v365 = vld [vmem:[%s1 + $0x20] sm:$0xff]
      %v366 = vld [vmem:[%s1 + $0x28] sm:$0xff]
      %v367 = vld [vmem:[%s1 + $0x30] sm:$0xff]
      %v368 = vld [vmem:[%s1 + $0x38] sm:$0xff]
      %v369 = vld [vmem:[%s1 + $0x40] sm:$0xff]
      %v370 = vld [vmem:[%s1 + $0x48] sm:$0xff]
      %v371 = vld [vmem:[%s1 + $0x50] sm:$0xff]
      %v372 = vld [vmem:[%s1 + $0x58] sm:$0xff]
      %v373 = vld [vmem:[%s1 + $0x60] sm:$0xff]
      %v374 = vld [vmem:[%s1 + $0x68] sm:$0xff]
      %v375 = vld [vmem:[%s1 + $0x70] sm:$0xff]
      %v376 = vld [vmem:[%s1 + $0x78] sm:$0xff]
      %v377 = vld [vmem:[%s2] sm:$0x1]
      %v379 = vlaneseq
      %v380 = vshrl.u32 %v379, 7
      %v381 = vsub.s32 0, %v380
      %v382 = vrot.slane %v377, %v381
      %384 = vmatprep.subr.mxu0 0.0
      %385 = vmatpush1.msra.mxu0 %v361
      %386 = vmatprep.subr.mxu0 0.0
      %387 = vmatpush1.msra.mxu0 %v362
      %388 = vmatprep.subr.mxu0 0.0
      %389 = vmatpush1.msra.mxu0 %v363
      %390 = vmatprep.subr.mxu0 0.0
      %391 = vmatpush1.msra.mxu0 %v364
      %392 = vmatprep.subr.mxu0 0.0
      %393 = vmatpush1.msra.mxu0 %v365
      %394 = vmatprep.subr.mxu0 0.0
      %395 = vmatpush1.msra.mxu0 %v366
      %396 = vmatprep.subr.mxu0 0.0
      %397 = vmatpush1.msra.mxu0 %v367
      %398 = vmatprep.subr.mxu0 0.0
      %399 = vmatpush1.msra.mxu0 %v368
      %400 = vmatprep.subr.mxu0 0.0
      %401 = vmatpush1.msra.mxu0 %v369
      %402 = vmatprep.subr.mxu0 0.0
      %403 = vmatpush1.msra.mxu0 %v370
      %404 = vmatprep.subr.mxu0 0.0
      %405 = vmatpush1.msra.mxu0 %v371
      %406 = vmatprep.subr.mxu0 0.0
      %407 = vmatpush1.msra.mxu0 %v372
      %408 = vmatprep.subr.mxu0 0.0
      %409 = vmatpush1.msra.mxu0 %v373
      %410 = vmatprep.subr.mxu0 0.0
      %411 = vmatpush1.msra.mxu0 %v374
      %412 = vmatprep.subr.mxu0 0.0
      %413 = vmatpush1.msra.mxu0 %v375
      %414 = vmatprep.subr.mxu0 0.0
      %415 = vmatpush1.msra.mxu0 %v376
      %416 = vmatprep.subr.mxu0 0.0
      %417 = vmatpush1.msra.mxu0 0.0
      %418 = vmatprep.subr.mxu0 0.0
      %419 = vmatpush1.msra.mxu0 0.0
      %420 = vmatprep.subr.mxu0 0.0
      %421 = vmatpush1.msra.mxu0 0.0
      %422 = vmatprep.subr.mxu0 0.0
      %423 = vmatpush1.msra.mxu0 0.0
      %424 = vmatprep.subr.mxu0 0.0
      %425 = vmatpush1.msra.mxu0 0.0
      %426 = vmatprep.subr.mxu0 0.0
      %427 = vmatpush1.msra.mxu0 0.0
      %428 = vmatprep.subr.mxu0 0.0
      %429 = vmatpush1.msra.mxu0 0.0
      %430 = vmatprep.subr.mxu0 0.0
      %431 = vmatpush1.msra.mxu0 0.0
      %432 = vmatprep.subr.mxu0 0.0
      %433 = vmatpush1.msra.mxu0 0.0
      %434 = vmatprep.subr.mxu0 0.0
      %435 = vmatpush1.msra.mxu0 0.0
      %436 = vmatprep.subr.mxu0 0.0
      %437 = vmatpush1.msra.mxu0 0.0
      %438 = vmatprep.subr.mxu0 0.0
      %439 = vmatpush1.msra.mxu0 0.0
      %440 = vmatprep.subr.mxu0 0.0
      %441 = vmatpush1.msra.mxu0 0.0
      %442 = vmatprep.subr.mxu0 0.0
      %443 = vmatpush1.msra.mxu0 0.0
      %444 = vmatprep.subr.mxu0 0.0
      %445 = vmatpush1.msra.mxu0 0.0
      %446 = vmatprep.subr.mxu0 0.0
      %447 = vmatpush1.msra.mxu0 0.0
      %448 = vmatprep.mubr.f32.mxu0 0.0
      %449 = vmatmul.mubr.f32.gmra.mrb[0].mxu0 %v307
      %v450 = vpop.f32.mrb[0].mxu0
      %v451 = vadd.f32 %v382, %v450
      %v452 = vpop.f32.mrb[0].mxu0
      %453 = vmatprep.mubr.f32.mxu0 0.0
      %454 = vmatmul.mubr.f32.gmra.mrb[0].mxu0 %v308
      %v455 = vpop.f32.mrb[0].mxu0
      %v456 = vadd.f32 %v382, %v455
      %v457 = vpop.f32.mrb[0].mxu0
      %458 = vmatprep.mubr.f32.mxu0 0.0
      %459 = vmatmul.mubr.f32.gmra.mrb[0].mxu0 %v309
      %v460 = vpop.f32.mrb[0].mxu0
      %v461 = vadd.f32 %v382, %v460
      %v462 = vpop.f32.mrb[0].mxu0
      %463 = vmatprep.mubr.f32.mxu0 0.0
      %464 = vmatmul.mubr.f32.gmra.mrb[0].mxu0 %v310
      %v465 = vpop.f32.mrb[0].mxu0
      %v466 = vadd.f32 %v382, %v465
      %v467 = vpop.f32.mrb[0].mxu0
      %468 = vmatprep.mubr.f32.mxu0 0.0
      %469 = vmatmul.mubr.f32.gmra.mrb[0].mxu0 %v311
      %v470 = vpop.f32.mrb[0].mxu0
      %v471 = vadd.f32 %v382, %v470
      %v472 = vpop.f32.mrb[0].mxu0
      %473 = vmatprep.mubr.f32.mxu0 0.0
      %474 = vmatmul.mubr.f32.gmra.mrb[0].mxu0 %v312
      %v475 = vpop.f32.mrb[0].mxu0
      %v476 = vadd.f32 %v382, %v475
      %v477 = vpop.f32.mrb[0].mxu0
      %478 = vmatprep.mubr.f32.mxu0 0.0
      %479 = vmatmul.mubr.f32.gmra.mrb[0].mxu0 %v313
      %v480 = vpop.f32.mrb[0].mxu0
      %v481 = vadd.f32 %v382, %v480
      %v482 = vpop.f32.mrb[0].mxu0
      %483 = vmatprep.mubr.f32.mxu0 0.0
      %484 = vmatmul.mubr.f32.gmra.mrb[0].mxu0 %v314
      %v485 = vpop.f32.mrb[0].mxu0
      %v486 = vadd.f32 %v382, %v485
      %v487 = vpop.f32.mrb[0].mxu0
      %488 = vmatprep.mubr.f32.mxu0 0.0
      %489 = vmatmul.mubr.f32.gmra.mrb[0].mxu0 %v315
      %v490 = vpop.f32.mrb[0].mxu0
      %v491 = vadd.f32 %v382, %v490
      %v492 = vpop.f32.mrb[0].mxu0
      %493 = vmatprep.mubr.f32.mxu0 0.0
      %494 = vmatmul.mubr.f32.gmra.mrb[0].mxu0 %v316
      %v495 = vpop.f32.mrb[0].mxu0
      %v496 = vadd.f32 %v382, %v495
      %v497 = vpop.f32.mrb[0].mxu0
      %498 = vmatprep.mubr.f32.mxu0 0.0
      %499 = vmatmul.mubr.f32.gmra.mrb[0].mxu0 %v317
      %v500 = vpop.f32.mrb[0].mxu0
      %v501 = vadd.f32 %v382, %v500
      %v502 = vpop.f32.mrb[0].mxu0
      %503 = vmatprep.mubr.f32.mxu0 0.0
      %504 = vmatmul.mubr.f32.gmra.mrb[0].mxu0 %v318
      %v505 = vpop.f32.mrb[0].mxu0
      %v506 = vadd.f32 %v382, %v505
      %v507 = vpop.f32.mrb[0].mxu0
      %508 = vmatprep.mubr.f32.mxu0 0.0
      %509 = vmatmul.mubr.f32.gmra.mrb[0].mxu0 %v319
      %v510 = vpop.f32.mrb[0].mxu0
      %v511 = vadd.f32 %v382, %v510
      %v512 = vpop.f32.mrb[0].mxu0
      %513 = vmatprep.mubr.f32.mxu0 0.0
      %514 = vmatmul.mubr.f32.gmra.mrb[0].mxu0 %v320
      %v515 = vpop.f32.mrb[0].mxu0
      %v516 = vadd.f32 %v382, %v515
      %v517 = vpop.f32.mrb[0].mxu0
      %518 = vmatprep.mubr.f32.mxu0 0.0
      %519 = vmatmul.mubr.f32.gmra.mrb[0].mxu0 %v321
      %v520 = vpop.f32.mrb[0].mxu0
      %v521 = vadd.f32 %v382, %v520
      %v522 = vpop.f32.mrb[0].mxu0
      %523 = vmatprep.mubr.f32.mxu0 0.0
      %524 = vmatmul.mubr.f32.gmra.mrb[0].mxu0 %v322
      %v525 = vpop.f32.mrb[0].mxu0
      %v526 = vadd.f32 %v382, %v525
      %v527 = vpop.f32.mrb[0].mxu0
      %528 = vmatprep.mubr.f32.mxu0 0.0
      %529 = vmatmul.mubr.f32.gmra.mrb[0].mxu0 %v323
      %v530 = vpop.f32.mrb[0].mxu0
      %v531 = vadd.f32 %v382, %v530
      %v532 = vpop.f32.mrb[0].mxu0
      %533 = vmatprep.mubr.f32.mxu0 0.0
      %534 = vmatmul.mubr.f32.gmra.mrb[0].mxu0 %v324
      %v535 = vpop.f32.mrb[0].mxu0
      %v536 = vadd.f32 %v382, %v535
      %v537 = vpop.f32.mrb[0].mxu0
      %538 = vmatprep.mubr.f32.mxu0 0.0
      %539 = vmatmul.mubr.f32.gmra.mrb[0].mxu0 %v325
      %v540 = vpop.f32.mrb[0].mxu0
      %v541 = vadd.f32 %v382, %v540
      %v542 = vpop.f32.mrb[0].mxu0
      %543 = vmatprep.mubr.f32.mxu0 0.0
      %544 = vmatmul.mubr.f32.gmra.mrb[0].mxu0 %v326
      %v545 = vpop.f32.mrb[0].mxu0
      %v546 = vadd.f32 %v382, %v545
      %v547 = vpop.f32.mrb[0].mxu0
      %548 = vmatprep.mubr.f32.mxu0 0.0
      %549 = vmatmul.mubr.f32.gmra.mrb[0].mxu0 %v327
      %v550 = vpop.f32.mrb[0].mxu0
      %v551 = vadd.f32 %v382, %v550
      %v552 = vpop.f32.mrb[0].mxu0
      %553 = vmatprep.mubr.f32.mxu0 0.0
      %554 = vmatmul.mubr.f32.gmra.mrb[0].mxu0 %v328
      %v555 = vpop.f32.mrb[0].mxu0
      %v556 = vadd.f32 %v382, %v555
      %v557 = vpop.f32.mrb[0].mxu0
      %558 = vmatprep.mubr.f32.mxu0 0.0
      %559 = vmatmul.mubr.f32.gmra.mrb[0].mxu0 %v329
      %v560 = vpop.f32.mrb[0].mxu0
      %v561 = vadd.f32 %v382, %v560
      %v562 = vpop.f32.mrb[0].mxu0
      %563 = vmatprep.mubr.f32.mxu0 0.0
      %564 = vmatmul.mubr.f32.gmra.mrb[0].mxu0 %v330
      %v565 = vpop.f32.mrb[0].mxu0
      %v566 = vadd.f32 %v382, %v565
      %v567 = vpop.f32.mrb[0].mxu0
      %568 = vmatprep.mubr.f32.mxu0 0.0
      %569 = vmatmul.mubr.f32.gmra.mrb[0].mxu0 %v331
      %v570 = vpop.f32.mrb[0].mxu0
      %v571 = vadd.f32 %v382, %v570
      %v572 = vpop.f32.mrb[0].mxu0
      %573 = vmatprep.mubr.f32.mxu0 0.0
      %574 = vmatmul.mubr.f32.gmra.mrb[0].mxu0 %v332
      %v575 = vpop.f32.mrb[0].mxu0
      %v576 = vadd.f32 %v382, %v575
      %v577 = vpop.f32.mrb[0].mxu0
      %578 = vmatprep.mubr.f32.mxu0 0.0
      %579 = vmatmul.mubr.f32.gmra.mrb[0].mxu0 %v333
      %v580 = vpop.f32.mrb[0].mxu0
      %v581 = vadd.f32 %v382, %v580
      %v582 = vpop.f32.mrb[0].mxu0
      %583 = vmatprep.mubr.f32.mxu0 0.0
      %584 = vmatmul.mubr.f32.gmra.mrb[0].mxu0 %v334
      %v585 = vpop.f32.mrb[0].mxu0
      %v586 = vadd.f32 %v382, %v585
      %v587 = vpop.f32.mrb[0].mxu0
      %588 = vmatprep.mubr.f32.mxu0 0.0
      %589 = vmatmul.mubr.f32.gmra.mrb[0].mxu0 %v335
      %v590 = vpop.f32.mrb[0].mxu0
      %v591 = vadd.f32 %v382, %v590
      %v592 = vpop.f32.mrb[0].mxu0
      %593 = vmatprep.mubr.f32.mxu0 0.0
      %594 = vmatmul.mubr.f32.gmra.mrb[0].mxu0 %v336
      %v595 = vpop.f32.mrb[0].mxu0
      %v596 = vadd.f32 %v382, %v595
      %v597 = vpop.f32.mrb[0].mxu0
      %598 = vmatprep.mubr.f32.mxu0 0.0
      %599 = vmatmul.mubr.f32.gmra.mrb[0].mxu0 %v337
      %v600 = vpop.f32.mrb[0].mxu0
      %v601 = vadd.f32 %v382, %v600
      %v602 = vpop.f32.mrb[0].mxu0
      %603 = vmatprep.mubr.f32.mxu0 0.0
      %604 = vmatmul.mubr.f32.gmra.mrb[0].mxu0 %v338
      %v605 = vpop.f32.mrb[0].mxu0
      %v606 = vadd.f32 %v382, %v605
      %v607 = vpop.f32.mrb[0].mxu0
      %608 = vmatprep.mubr.f32.mxu0 0.0
      %609 = vmatmul.mubr.f32.gmra.mrb[0].mxu0 %v339
      %v610 = vpop.f32.mrb[0].mxu0
      %v611 = vadd.f32 %v382, %v610
      %v612 = vpop.f32.mrb[0].mxu0
      %613 = vmatprep.mubr.f32.mxu0 0.0
      %614 = vmatmul.mubr.f32.gmra.mrb[0].mxu0 %v340
      %v615 = vpop.f32.mrb[0].mxu0
      %v616 = vadd.f32 %v382, %v615
      %v617 = vpop.f32.mrb[0].mxu0
      %618 = vmatprep.mubr.f32.mxu0 0.0
      %619 = vmatmul.mubr.f32.gmra.mrb[0].mxu0 %v341
      %v620 = vpop.f32.mrb[0].mxu0
      %v621 = vadd.f32 %v382, %v620
      %v622 = vpop.f32.mrb[0].mxu0
      %623 = vmatprep.mubr.f32.mxu0 0.0
      %624 = vmatmul.mubr.f32.gmra.mrb[0].mxu0 %v342
      %v625 = vpop.f32.mrb[0].mxu0
      %v626 = vadd.f32 %v382, %v625
      %v627 = vpop.f32.mrb[0].mxu0
      %628 = vmatprep.mubr.f32.mxu0 0.0
      %629 = vmatmul.mubr.f32.gmra.mrb[0].mxu0 %v343
      %v630 = vpop.f32.mrb[0].mxu0
      %v631 = vadd.f32 %v382, %v630
      %v632 = vpop.f32.mrb[0].mxu0
      %633 = vmatprep.mubr.f32.mxu0 0.0
      %634 = vmatmul.mubr.f32.gmra.mrb[0].mxu0 %v344
      %v635 = vpop.f32.mrb[0].mxu0
      %v636 = vadd.f32 %v382, %v635
      %v637 = vpop.f32.mrb[0].mxu0
      %638 = vmatprep.mubr.f32.mxu0 0.0
      %639 = vmatmul.mubr.f32.gmra.mrb[0].mxu0 %v345
      %v640 = vpop.f32.mrb[0].mxu0
      %v641 = vadd.f32 %v382, %v640
      %v642 = vpop.f32.mrb[0].mxu0
      %643 = vmatprep.mubr.f32.mxu0 0.0
      %644 = vmatmul.mubr.f32.gmra.mrb[0].mxu0 %v346
      %v645 = vpop.f32.mrb[0].mxu0
      %v646 = vadd.f32 %v382, %v645
      %v647 = vpop.f32.mrb[0].mxu0
      %648 = vmatprep.mubr.f32.mxu0 0.0
      %649 = vmatmul.mubr.f32.gmra.mrb[0].mxu0 %v347
      %v650 = vpop.f32.mrb[0].mxu0
      %v651 = vadd.f32 %v382, %v650
      %v652 = vpop.f32.mrb[0].mxu0
      %653 = vmatprep.mubr.f32.mxu0 0.0
      %654 = vmatmul.mubr.f32.gmra.mrb[0].mxu0 %v348
      %v655 = vpop.f32.mrb[0].mxu0
      %v656 = vadd.f32 %v382, %v655
      %v657 = vpop.f32.mrb[0].mxu0
      %658 = vmatprep.mubr.f32.mxu0 0.0
      %659 = vmatmul.mubr.f32.gmra.mrb[0].mxu0 %v349
      %v660 = vpop.f32.mrb[0].mxu0
      %v661 = vadd.f32 %v382, %v660
      %v662 = vpop.f32.mrb[0].mxu0
      %663 = vmatprep.mubr.f32.mxu0 0.0
      %664 = vmatmul.mubr.f32.gmra.mrb[0].mxu0 %v350
      %v665 = vpop.f32.mrb[0].mxu0
      %v666 = vadd.f32 %v382, %v665
      %v667 = vpop.f32.mrb[0].mxu0
      %668 = vmatprep.mubr.f32.mxu0 0.0
      %669 = vmatmul.mubr.f32.gmra.mrb[0].mxu0 %v351
      %v670 = vpop.f32.mrb[0].mxu0
      %v671 = vadd.f32 %v382, %v670
      %v672 = vpop.f32.mrb[0].mxu0
      %673 = vmatprep.mubr.f32.mxu0 0.0
      %674 = vmatmul.mubr.f32.gmra.mrb[0].mxu0 %v352
      %v675 = vpop.f32.mrb[0].mxu0
      %v676 = vadd.f32 %v382, %v675
      %v677 = vpop.f32.mrb[0].mxu0
      %678 = vmatprep.mubr.f32.mxu0 0.0
      %679 = vmatmul.mubr.f32.gmra.mrb[0].mxu0 %v353
      %v680 = vpop.f32.mrb[0].mxu0
      %v681 = vadd.f32 %v382, %v680
      %v682 = vpop.f32.mrb[0].mxu0
      %683 = vmatprep.mubr.f32.mxu0 0.0
      %684 = vmatmul.mubr.f32.gmra.mrb[0].mxu0 %v354
      %v685 = vpop.f32.mrb[0].mxu0
      %v686 = vadd.f32 %v382, %v685
      %v687 = vpop.f32.mrb[0].mxu0
      %688 = vmatprep.mubr.f32.mxu0 0.0
      %689 = vmatmul.mubr.f32.gmra.mrb[0].mxu0 %v355
      %v690 = vpop.f32.mrb[0].mxu0
      %v691 = vadd.f32 %v382, %v690
      %v692 = vpop.f32.mrb[0].mxu0
      %693 = vmatprep.mubr.f32.mxu0 0.0
      %694 = vmatmul.mubr.f32.gmra.mrb[0].mxu0 %v356
      %v695 = vpop.f32.mrb[0].mxu0
      %v696 = vadd.f32 %v382, %v695
      %v697 = vpop.f32.mrb[0].mxu0
      %698 = vmatprep.mubr.f32.mxu0 0.0
      %699 = vmatmul.mubr.f32.gmra.mrb[0].mxu0 %v357
      %v700 = vpop.f32.mrb[0].mxu0
      %v701 = vadd.f32 %v382, %v700
      %v702 = vpop.f32.mrb[0].mxu0
      %703 = vmatprep.mubr.f32.mxu0 0.0
      %704 = vmatmul.mubr.f32.gmra.mrb[0].mxu0 %v358
      %v705 = vpop.f32.mrb[0].mxu0
      %v706 = vadd.f32 %v382, %v705
      %v707 = vpop.f32.mrb[0].mxu0
      %708 = vmatprep.mubr.f32.mxu0 0.0
      %709 = vmatmul.mubr.f32.gmra.mrb[0].mxu0 %v359
      %v710 = vpop.f32.mrb[0].mxu0
      %v711 = vadd.f32 %v382, %v710
      %v712 = vpop.f32.mrb[0].mxu0
      %713 = vmatprep.mubr.f32.mxu0 0.0
      %714 = vmatmul.mubr.f32.gmra.mrb[0].mxu0 %v360
      %v715 = vpop.f32.mrb[0].mxu0
      %v716 = vadd.f32 %v382, %v715
      %v717 = vpop.f32.mrb[0].mxu0
      %718 = vdwg.mxu0
      %v719 = vmax.f32 %v451, 0.0
      %v720 = vmax.f32 %v456, 0.0
      %v721 = vmax.f32 %v461, 0.0
      %v722 = vmax.f32 %v466, 0.0
      %v723 = vmax.f32 %v471, 0.0
      %v724 = vmax.f32 %v476, 0.0
      %v725 = vmax.f32 %v481, 0.0
      %v726 = vmax.f32 %v486, 0.0
      %v727 = vmax.f32 %v491, 0.0
      %v728 = vmax.f32 %v496, 0.0
      %v729 = vmax.f32 %v501, 0.0
      %v730 = vmax.f32 %v506, 0.0
      %v731 = vmax.f32 %v511, 0.0
      %v732 = vmax.f32 %v516, 0.0
      %v733 = vmax.f32 %v521, 0.0
      %v734 = vmax.f32 %v526, 0.0
      %v735 = vmax.f32 %v531, 0.0
      %v736 = vmax.f32 %v536, 0.0
      %v737 = vmax.f32 %v541, 0.0
      %v738 = vmax.f32 %v546, 0.0
      %v739 = vmax.f32 %v551, 0.0
      %v740 = vmax.f32 %v556, 0.0
      %v741 = vmax.f32 %v561, 0.0
      %v742 = vmax.f32 %v566, 0.0
      %v743 = vmax.f32 %v571, 0.0
      %v744 = vmax.f32 %v576, 0.0
      %v745 = vmax.f32 %v581, 0.0
      %v746 = vmax.f32 %v586, 0.0
      %v747 = vmax.f32 %v591, 0.0
      %v748 = vmax.f32 %v596, 0.0
      %v749 = vmax.f32 %v601, 0.0
      %v750 = vmax.f32 %v606, 0.0
      %v751 = vmax.f32 %v611, 0.0
      %v752 = vmax.f32 %v616, 0.0
      %v753 = vmax.f32 %v621, 0.0
      %v754 = vmax.f32 %v626, 0.0
      %v755 = vmax.f32 %v631, 0.0
      %v756 = vmax.f32 %v636, 0.0
      %v757 = vmax.f32 %v641, 0.0
      %v758 = vmax.f32 %v646, 0.0
      %v759 = vmax.f32 %v651, 0.0
      %v760 = vmax.f32 %v656, 0.0
      %v761 = vmax.f32 %v661, 0.0
      %v762 = vmax.f32 %v666, 0.0
      %v763 = vmax.f32 %v671, 0.0
      %v764 = vmax.f32 %v676, 0.0
      %v765 = vmax.f32 %v681, 0.0
      %v766 = vmax.f32 %v686, 0.0
      %v767 = vmax.f32 %v691, 0.0
      %v768 = vmax.f32 %v696, 0.0
      %v769 = vmax.f32 %v701, 0.0
      %v770 = vmax.f32 %v706, 0.0
      %v771 = vmax.f32 %v711, 0.0
      %v772 = vmax.f32 %v716, 0.0
      %v773 = vmin.f32 %v719, 6.0
      %v774 = vmin.f32 %v720, 6.0
      %v775 = vmin.f32 %v721, 6.0
      %v776 = vmin.f32 %v722, 6.0
      %v777 = vmin.f32 %v723, 6.0
      %v778 = vmin.f32 %v724, 6.0
      %v779 = vmin.f32 %v725, 6.0
      %v780 = vmin.f32 %v726, 6.0
      %v781 = vmin.f32 %v727, 6.0
      %v782 = vmin.f32 %v728, 6.0
      %v783 = vmin.f32 %v729, 6.0
      %v784 = vmin.f32 %v730, 6.0
      %v785 = vmin.f32 %v731, 6.0
      %v786 = vmin.f32 %v732, 6.0
      %v787 = vmin.f32 %v733, 6.0
      %v788 = vmin.f32 %v734, 6.0
      %v789 = vmin.f32 %v735, 6.0
      %v790 = vmin.f32 %v736, 6.0
      %v791 = vmin.f32 %v737, 6.0
      %v792 = vmin.f32 %v738, 6.0
      %v793 = vmin.f32 %v739, 6.0
      %v794 = vmin.f32 %v740, 6.0
      %v795 = vmin.f32 %v741, 6.0
      %v796 = vmin.f32 %v742, 6.0
      %v797 = vmin.f32 %v743, 6.0
      %v798 = vmin.f32 %v744, 6.0
      %v799 = vmin.f32 %v745, 6.0
      %v800 = vmin.f32 %v746, 6.0
      %v801 = vmin.f32 %v747, 6.0
      %v802 = vmin.f32 %v748, 6.0
      %v803 = vmin.f32 %v749, 6.0
      %v804 = vmin.f32 %v750, 6.0
      %v805 = vmin.f32 %v751, 6.0
      %v806 = vmin.f32 %v752, 6.0
      %v807 = vmin.f32 %v753, 6.0
      %v808 = vmin.f32 %v754, 6.0
      %v809 = vmin.f32 %v755, 6.0
      %v810 = vmin.f32 %v756, 6.0
      %v811 = vmin.f32 %v757, 6.0
      %v812 = vmin.f32 %v758, 6.0
      %v813 = vmin.f32 %v759, 6.0
      %v814 = vmin.f32 %v760, 6.0
      %v815 = vmin.f32 %v761, 6.0
      %v816 = vmin.f32 %v762, 6.0
      %v817 = vmin.f32 %v763, 6.0
      %v818 = vmin.f32 %v764, 6.0
      %v819 = vmin.f32 %v765, 6.0
      %v820 = vmin.f32 %v766, 6.0
      %v821 = vmin.f32 %v767, 6.0
      %v822 = vmin.f32 %v768, 6.0
      %v823 = vmin.f32 %v769, 6.0
      %v824 = vmin.f32 %v770, 6.0
      %v825 = vmin.f32 %v771, 6.0
      %v826 = vmin.f32 %v772, 6.0
      %v827 = vstv %s304
      %v828 = vadd.s32 %v827, 1
      %v829 = vadd.s32 %v827, 2
      %v830 = vadd.s32 %v827, 3
      %v831 = vadd.s32 %v827, 4
      %v832 = vadd.s32 %v827, 5
      %v833 = vadd.s32 %v827, 6
      %v834 = vadd.s32 %v827, 7
      %v835 = vadd.s32 %v827, 8
      %v836 = vadd.s32 %v827, 9
      %v837 = vadd.s32 %v827, 10
      %v838 = vadd.s32 %v827, 11
      %v839 = vadd.s32 %v827, 12
      %v840 = vadd.s32 %v827, 13
      %v841 = vadd.s32 %v827, 14
      %v842 = vadd.s32 %v827, 15
      %v843 = vadd.s32 %v827, 16
      %v844 = vadd.s32 %v827, 17
      %v845 = vlaneseq
      %v846 = vshrl.u32 %v845, 7
      %v847 = vadd.s32 %v846, 8
      %v848 = vadd.s32 %v846, 16
      %vm849 = vcmp.ge.s32.totalorder %v827, 1
      %vm850 = vcmp.ge.s32.totalorder %v828, 1
      %vm851 = vcmp.ge.s32.totalorder %v829, 1
      %vm852 = vcmp.ge.s32.totalorder %v830, 1
      %vm853 = vcmp.ge.s32.totalorder %v831, 1
      %vm854 = vcmp.ge.s32.totalorder %v832, 1
      %vm855 = vcmp.ge.s32.totalorder %v833, 1
      %vm856 = vcmp.ge.s32.totalorder %v834, 1
      %vm857 = vcmp.ge.s32.totalorder %v835, 1
      %vm858 = vcmp.ge.s32.totalorder %v836, 1
      %vm859 = vcmp.ge.s32.totalorder %v837, 1
      %vm860 = vcmp.ge.s32.totalorder %v838, 1
      %vm861 = vcmp.ge.s32.totalorder %v839, 1
      %vm862 = vcmp.ge.s32.totalorder %v840, 1
      %vm863 = vcmp.ge.s32.totalorder %v841, 1
      %vm864 = vcmp.ge.s32.totalorder %v842, 1
      %vm865 = vcmp.ge.s32.totalorder %v843, 1
      %vm866 = vcmp.ge.s32.totalorder %v844, 1
      %vm867 = vcmp.le.s32.totalorder %v827, 16
      %vm868 = vcmp.le.s32.totalorder %v828, 16
      %vm869 = vcmp.le.s32.totalorder %v829, 16
      %vm870 = vcmp.le.s32.totalorder %v830, 16
      %vm871 = vcmp.le.s32.totalorder %v831, 16
      %vm872 = vcmp.le.s32.totalorder %v832, 16
      %vm873 = vcmp.le.s32.totalorder %v833, 16
      %vm874 = vcmp.le.s32.totalorder %v834, 16
      %vm875 = vcmp.le.s32.totalorder %v835, 16
      %vm876 = vcmp.le.s32.totalorder %v836, 16
      %vm877 = vcmp.le.s32.totalorder %v837, 16
      %vm878 = vcmp.le.s32.totalorder %v838, 16
      %vm879 = vcmp.le.s32.totalorder %v839, 16
      %vm880 = vcmp.le.s32.totalorder %v840, 16
      %vm881 = vcmp.le.s32.totalorder %v841, 16
      %vm882 = vcmp.le.s32.totalorder %v842, 16
      %vm883 = vcmp.le.s32.totalorder %v843, 16
      %vm884 = vcmp.le.s32.totalorder %v844, 16
      %vm885 = vmand %vm849, %vm867
      %vm886 = vmand %vm850, %vm868
      %vm887 = vmand %vm851, %vm869
      %vm888 = vmand %vm852, %vm870
      %vm889 = vmand %vm853, %vm871
      %vm890 = vmand %vm854, %vm872
      %vm891 = vmand %vm855, %vm873
      %vm892 = vmand %vm856, %vm874
      %vm893 = vmand %vm857, %vm875
      %vm894 = vmand %vm858, %vm876
      %vm895 = vmand %vm859, %vm877
      %vm896 = vmand %vm860, %vm878
      %vm897 = vmand %vm861, %vm879
      %vm898 = vmand %vm862, %vm880
      %vm899 = vmand %vm863, %vm881
      %vm900 = vmand %vm864, %vm882
      %vm901 = vmand %vm865, %vm883
      %vm902 = vmand %vm866, %vm884
      %vm903 = vcmp.ge.s32.totalorder %v846, 1
      %vm904 = vcmp.ge.s32.totalorder %v847, 1
      %vm905 = vcmp.ge.s32.totalorder %v848, 1
      %vm906 = vmand %vm885, %vm903
      %vm907 = vmand %vm885, %vm904
      %vm908 = vmand %vm885, %vm905
      %vm909 = vmand %vm886, %vm903
      %vm910 = vmand %vm886, %vm904
      %vm911 = vmand %vm886, %vm905
      %vm912 = vmand %vm887, %vm903
      %vm913 = vmand %vm887, %vm904
      %vm914 = vmand %vm887, %vm905
      %vm915 = vmand %vm888, %vm903
      %vm916 = vmand %vm888, %vm904
      %vm917 = vmand %vm888, %vm905
      %vm918 = vmand %vm889, %vm903
      %vm919 = vmand %vm889, %vm904
      %vm920 = vmand %vm889, %vm905
      %vm921 = vmand %vm890, %vm903
      %vm922 = vmand %vm890, %vm904
      %vm923 = vmand %vm890, %vm905
      %vm924 = vmand %vm891, %vm903
      %vm925 = vmand %vm891, %vm904
      %vm926 = vmand %vm891, %vm905
      %vm927 = vmand %vm892, %vm903
      %vm928 = vmand %vm892, %vm904
      %vm929 = vmand %vm892, %vm905
      %vm930 = vmand %vm893, %vm903
      %vm931 = vmand %vm893, %vm904
      %vm932 = vmand %vm893, %vm905
      %vm933 = vmand %vm894, %vm903
      %vm934 = vmand %vm894, %vm904
      %vm935 = vmand %vm894, %vm905
      %vm936 = vmand %vm895, %vm903
      %vm937 = vmand %vm895, %vm904
      %vm938 = vmand %vm895, %vm905
      %vm939 = vmand %vm896, %vm903
      %vm940 = vmand %vm896, %vm904
      %vm941 = vmand %vm896, %vm905
      %vm942 = vmand %vm897, %vm903
      %vm943 = vmand %vm897, %vm904
      %vm944 = vmand %vm897, %vm905
      %vm945 = vmand %vm898, %vm903
      %vm946 = vmand %vm898, %vm904
      %vm947 = vmand %vm898, %vm905
      %vm948 = vmand %vm899, %vm903
      %vm949 = vmand %vm899, %vm904
      %vm950 = vmand %vm899, %vm905
      %vm951 = vmand %vm900, %vm903
      %vm952 = vmand %vm900, %vm904
      %vm953 = vmand %vm900, %vm905
      %vm954 = vmand %vm901, %vm903
      %vm955 = vmand %vm901, %vm904
      %vm956 = vmand %vm901, %vm905
      %vm957 = vmand %vm902, %vm903
      %vm958 = vmand %vm902, %vm904
      %vm959 = vmand %vm902, %vm905
      %vm960 = vcmp.le.s32.totalorder %v846, 16
      %vm961 = vcmp.le.s32.totalorder %v847, 16
      %vm962 = vcmp.le.s32.totalorder %v848, 16
      %vm963 = vmand %vm906, %vm960
      %vm964 = vmand %vm907, %vm961
      %vm965 = vmand %vm908, %vm962
      %vm966 = vmand %vm909, %vm960
      %vm967 = vmand %vm910, %vm961
      %vm968 = vmand %vm911, %vm962
      %vm969 = vmand %vm912, %vm960
      %vm970 = vmand %vm913, %vm961
      %vm971 = vmand %vm914, %vm962
      %vm972 = vmand %vm915, %vm960
      %vm973 = vmand %vm916, %vm961
      %vm974 = vmand %vm917, %vm962
      %vm975 = vmand %vm918, %vm960
      %vm976 = vmand %vm919, %vm961
      %vm977 = vmand %vm920, %vm962
      %vm978 = vmand %vm921, %vm960
      %vm979 = vmand %vm922, %vm961
      %vm980 = vmand %vm923, %vm962
      %vm981 = vmand %vm924, %vm960
      %vm982 = vmand %vm925, %vm961
      %vm983 = vmand %vm926, %vm962
      %vm984 = vmand %vm927, %vm960
      %vm985 = vmand %vm928, %vm961
      %vm986 = vmand %vm929, %vm962
      %vm987 = vmand %vm930, %vm960
      %vm988 = vmand %vm931, %vm961
      %vm989 = vmand %vm932, %vm962
      %vm990 = vmand %vm933, %vm960
      %vm991 = vmand %vm934, %vm961
      %vm992 = vmand %vm935, %vm962
      %vm993 = vmand %vm936, %vm960
      %vm994 = vmand %vm937, %vm961
      %vm995 = vmand %vm938, %vm962
      %vm996 = vmand %vm939, %vm960
      %vm997 = vmand %vm940, %vm961
      %vm998 = vmand %vm941, %vm962
      %vm999 = vmand %vm942, %vm960
      %vm1000 = vmand %vm943, %vm961
      %vm1001 = vmand %vm944, %vm962
      %vm1002 = vmand %vm945, %vm960
      %vm1003 = vmand %vm946, %vm961
      %vm1004 = vmand %vm947, %vm962
      %vm1005 = vmand %vm948, %vm960
      %vm1006 = vmand %vm949, %vm961
      %vm1007 = vmand %vm950, %vm962
      %vm1008 = vmand %vm951, %vm960
      %vm1009 = vmand %vm952, %vm961
      %vm1010 = vmand %vm953, %vm962
      %vm1011 = vmand %vm954, %vm960
      %vm1012 = vmand %vm955, %vm961
      %vm1013 = vmand %vm956, %vm962
      %vm1014 = vmand %vm957, %vm960
      %vm1015 = vmand %vm958, %vm961
      %vm1016 = vmand %vm959, %vm962
      %v1017 = vsel %vm963, %v773, 0.0
      %v1018 = vsel %vm964, %v774, 0.0
      %v1019 = vsel %vm965, %v775, 0.0
      %v1020 = vsel %vm966, %v776, 0.0
      %v1021 = vsel %vm967, %v777, 0.0
      %v1022 = vsel %vm968, %v778, 0.0
      %v1023 = vsel %vm969, %v779, 0.0
      %v1024 = vsel %vm970, %v780, 0.0
      %v1025 = vsel %vm971, %v781, 0.0
      %v1026 = vsel %vm972, %v782, 0.0
      %v1027 = vsel %vm973, %v783, 0.0
      %v1028 = vsel %vm974, %v784, 0.0
      %v1029 = vsel %vm975, %v785, 0.0
      %v1030 = vsel %vm976, %v786, 0.0
      %v1031 = vsel %vm977, %v787, 0.0
      %v1032 = vsel %vm978, %v788, 0.0
      %v1033 = vsel %vm979, %v789, 0.0
      %v1034 = vsel %vm980, %v790, 0.0
      %v1035 = vsel %vm981, %v791, 0.0
      %v1036 = vsel %vm982, %v792, 0.0
      %v1037 = vsel %vm983, %v793, 0.0
      %v1038 = vsel %vm984, %v794, 0.0
      %v1039 = vsel %vm985, %v795, 0.0
      %v1040 = vsel %vm986, %v796, 0.0
      %v1041 = vsel %vm987, %v797, 0.0
      %v1042 = vsel %vm988, %v798, 0.0
      %v1043 = vsel %vm989, %v799, 0.0
      %v1044 = vsel %vm990, %v800, 0.0
      %v1045 = vsel %vm991, %v801, 0.0
      %v1046 = vsel %vm992, %v802, 0.0
      %v1047 = vsel %vm993, %v803, 0.0
      %v1048 = vsel %vm994, %v804, 0.0
      %v1049 = vsel %vm995, %v805, 0.0
      %v1050 = vsel %vm996, %v806, 0.0
      %v1051 = vsel %vm997, %v807, 0.0
      %v1052 = vsel %vm998, %v808, 0.0
      %v1053 = vsel %vm999, %v809, 0.0
      %v1054 = vsel %vm1000, %v810, 0.0
      %v1055 = vsel %vm1001, %v811, 0.0
      %v1056 = vsel %vm1002, %v812, 0.0
      %v1057 = vsel %vm1003, %v813, 0.0
      %v1058 = vsel %vm1004, %v814, 0.0
      %v1059 = vsel %vm1005, %v815, 0.0
      %v1060 = vsel %vm1006, %v816, 0.0
      %v1061 = vsel %vm1007, %v817, 0.0
      %v1062 = vsel %vm1008, %v818, 0.0
      %v1063 = vsel %vm1009, %v819, 0.0
      %v1064 = vsel %vm1010, %v820, 0.0
      %v1065 = vsel %vm1011, %v821, 0.0
      %v1066 = vsel %vm1012, %v822, 0.0
      %v1067 = vsel %vm1013, %v823, 0.0
      %v1068 = vsel %vm1014, %v824, 0.0
      %v1069 = vsel %vm1015, %v825, 0.0
      %v1070 = vsel %vm1016, %v826, 0.0
      %1071 = vst [vmem:[#allocation2] sm:$0xff] %v1017
      %1072 = vst [vmem:[#allocation2 + $0x8] sm:$0xff] %v1018
      %1073 = vst [vmem:[#allocation2 + $0x10] sm:$0xff] %v1019
      %1074 = vst [vmem:[#allocation2 + $0x18] sm:$0xff] %v1020
      %1075 = vst [vmem:[#allocation2 + $0x20] sm:$0xff] %v1021
      %1076 = vst [vmem:[#allocation2 + $0x28] sm:$0xff] %v1022
      %1077 = vst [vmem:[#allocation2 + $0x30] sm:$0xff] %v1023
      %1078 = vst [vmem:[#allocation2 + $0x38] sm:$0xff] %v1024
      %1079 = vst [vmem:[#allocation2 + $0x40] sm:$0xff] %v1025
      %1080 = vst [vmem:[#allocation2 + $0x48] sm:$0xff] %v1026
      %1081 = vst [vmem:[#allocation2 + $0x50] sm:$0xff] %v1027
      %1082 = vst [vmem:[#allocation2 + $0x58] sm:$0xff] %v1028
      %1083 = vst [vmem:[#allocation2 + $0x60] sm:$0xff] %v1029
      %1084 = vst [vmem:[#allocation2 + $0x68] sm:$0xff] %v1030
      %1085 = vst [vmem:[#allocation2 + $0x70] sm:$0xff] %v1031
      %1086 = vst [vmem:[#allocation2 + $0x78] sm:$0xff] %v1032
      %1087 = vst [vmem:[#allocation2 + $0x80] sm:$0xff] %v1033
      %1088 = vst [vmem:[#allocation2 + $0x88] sm:$0xff] %v1034
      %1089 = vst [vmem:[#allocation2 + $0x90] sm:$0xff] %v1035
      %1090 = vst [vmem:[#allocation2 + $0x98] sm:$0xff] %v1036
      %1091 = vst [vmem:[#allocation2 + $0xa0] sm:$0xff] %v1037
      %1092 = vst [vmem:[#allocation2 + $0xa8] sm:$0xff] %v1038
      %1093 = vst [vmem:[#allocation2 + $0xb0] sm:$0xff] %v1039
      %1094 = vst [vmem:[#allocation2 + $0xb8] sm:$0xff] %v1040
      %1095 = vst [vmem:[#allocation2 + $0xc0] sm:$0xff] %v1041
      %1096 = vst [vmem:[#allocation2 + $0xc8] sm:$0xff] %v1042
      %1097 = vst [vmem:[#allocation2 + $0xd0] sm:$0xff] %v1043
      %1098 = vst [vmem:[#allocation2 + $0xd8] sm:$0xff] %v1044
      %1099 = vst [vmem:[#allocation2 + $0xe0] sm:$0xff] %v1045
      %1100 = vst [vmem:[#allocation2 + $0xe8] sm:$0xff] %v1046
      %1101 = vst [vmem:[#allocation2 + $0xf0] sm:$0xff] %v1047
      %1102 = vst [vmem:[#allocation2 + $0xf8] sm:$0xff] %v1048
      %1103 = vst [vmem:[#allocation2 + $0x100] sm:$0xff] %v1049
      %1104 = vst [vmem:[#allocation2 + $0x108] sm:$0xff] %v1050
      %1105 = vst [vmem:[#allocation2 + $0x110] sm:$0xff] %v1051
      %1106 = vst [vmem:[#allocation2 + $0x118] sm:$0xff] %v1052
      %1107 = vst [vmem:[#allocation2 + $0x120] sm:$0xff] %v1053
      %1108 = vst [vmem:[#allocation2 + $0x128] sm:$0xff] %v1054
      %1109 = vst [vmem:[#allocation2 + $0x130] sm:$0xff] %v1055
      %1110 = vst [vmem:[#allocation2 + $0x138] sm:$0xff] %v1056
      %1111 = vst [vmem:[#allocation2 + $0x140] sm:$0xff] %v1057
      %1112 = vst [vmem:[#allocation2 + $0x148] sm:$0xff] %v1058
      %1113 = vst [vmem:[#allocation2 + $0x150] sm:$0xff] %v1059
      %1114 = vst [vmem:[#allocation2 + $0x158] sm:$0xff] %v1060
      %1115 = vst [vmem:[#allocation2 + $0x160] sm:$0xff] %v1061
      %1116 = vst [vmem:[#allocation2 + $0x168] sm:$0xff] %v1062
      %1117 = vst [vmem:[#allocation2 + $0x170] sm:$0xff] %v1063
      %1118 = vst [vmem:[#allocation2 + $0x178] sm:$0xff] %v1064
      %1119 = vst [vmem:[#allocation2 + $0x180] sm:$0xff] %v1065
      %1120 = vst [vmem:[#allocation2 + $0x188] sm:$0xff] %v1066
      %1121 = vst [vmem:[#allocation2 + $0x190] sm:$0xff] %v1067
      %1122 = vst [vmem:[#allocation2 + $0x198] sm:$0xff] %v1068
      %1123 = vst [vmem:[#allocation2 + $0x1a0] sm:$0xff] %v1069
      %1124 = vst [vmem:[#allocation2 + $0x1a8] sm:$0xff] %v1070
      %v1125 = vld [vmem:[%s3] sm:$0x7]
      %v1126 = vld [vmem:[%s3 + $0x4] sm:$0x7]
      %v1127 = vld [vmem:[%s3 + $0x8] sm:$0x7]
      %v1128 = vld [vmem:[#allocation2] sm:$0xff]
      %v1129 = vld [vmem:[#allocation2 + $0x8] sm:$0xff]
      %v1130 = vld [vmem:[#allocation2 + $0x18] sm:$0xff]
      %v1131 = vld [vmem:[#allocation2 + $0x20] sm:$0xff]
      %v1132 = vld [vmem:[#allocation2 + $0x30] sm:$0xff]
      %v1133 = vld [vmem:[#allocation2 + $0x38] sm:$0xff]
      %v1134 = vld [vmem:[#allocation2 + $0x48] sm:$0xff]
      %v1135 = vld [vmem:[#allocation2 + $0x50] sm:$0xff]
      %v1136 = vld [vmem:[#allocation2 + $0x60] sm:$0xff]
      %v1137 = vld [vmem:[#allocation2 + $0x68] sm:$0xff]
      %v1138 = vld [vmem:[#allocation2 + $0x78] sm:$0xff]
      %v1139 = vld [vmem:[#allocation2 + $0x80] sm:$0xff]
      %v1140 = vld [vmem:[#allocation2 + $0x90] sm:$0xff]
      %v1141 = vld [vmem:[#allocation2 + $0x98] sm:$0xff]
      %v1142 = vld [vmem:[#allocation2 + $0xa8] sm:$0xff]
      %v1143 = vld [vmem:[#allocation2 + $0xb0] sm:$0xff]
      %v1144 = vld [vmem:[#allocation2 + $0xc0] sm:$0xff]
      %v1145 = vld [vmem:[#allocation2 + $0xc8] sm:$0xff]
      %v1146 = vld [vmem:[#allocation2 + $0xd8] sm:$0xff]
      %v1147 = vld [vmem:[#allocation2 + $0xe0] sm:$0xff]
      %v1148 = vld [vmem:[#allocation2 + $0xf0] sm:$0xff]
      %v1149 = vld [vmem:[#allocation2 + $0xf8] sm:$0xff]
      %v1150 = vld [vmem:[#allocation2 + $0x108] sm:$0xff]
      %v1151 = vld [vmem:[#allocation2 + $0x110] sm:$0xff]
      %v1152 = vld [vmem:[#allocation2 + $0x120] sm:$0xff]
      %v1153 = vld [vmem:[#allocation2 + $0x128] sm:$0xff]
      %v1154 = vld [vmem:[#allocation2 + $0x138] sm:$0xff]
      %v1155 = vld [vmem:[#allocation2 + $0x140] sm:$0xff]
      %v1156 = vld [vmem:[#allocation2 + $0x150] sm:$0xff]
      %v1157 = vld [vmem:[#allocation2 + $0x158] sm:$0xff]
      %v1158 = vld [vmem:[#allocation2 + $0x168] sm:$0xff]
      %v1159 = vld [vmem:[#allocation2 + $0x170] sm:$0xff]
      %v1160 = vlaneseq
      %v1161 = vshrl.u32 %v1160, 7
      %v1162 = vsub.s32 0, %v1161
      %v1163 = vrot.slane %v1125, %v1162
      %v1164 = vmul.f32 %v1128, %v1163
      %v1165 = vmul.f32 %v1129, %v1163
      %v1166 = vmul.f32 %v1130, %v1163
      %v1167 = vmul.f32 %v1131, %v1163
      %v1168 = vmul.f32 %v1132, %v1163
      %v1169 = vmul.f32 %v1133, %v1163
      %v1170 = vmul.f32 %v1134, %v1163
      %v1171 = vmul.f32 %v1135, %v1163
      %v1172 = vmul.f32 %v1136, %v1163
      %v1173 = vmul.f32 %v1137, %v1163
      %v1174 = vmul.f32 %v1138, %v1163
      %v1175 = vmul.f32 %v1139, %v1163
      %v1176 = vmul.f32 %v1140, %v1163
      %v1177 = vmul.f32 %v1141, %v1163
      %v1178 = vmul.f32 %v1142, %v1163
      %v1179 = vmul.f32 %v1143, %v1163
      %v1180 = vmul.f32 %v1144, %v1163
      %v1181 = vmul.f32 %v1145, %v1163
      %v1182 = vmul.f32 %v1146, %v1163
      %v1183 = vmul.f32 %v1147, %v1163
      %v1184 = vmul.f32 %v1148, %v1163
      %v1185 = vmul.f32 %v1149, %v1163
      %v1186 = vmul.f32 %v1150, %v1163
      %v1187 = vmul.f32 %v1151, %v1163
      %v1188 = vmul.f32 %v1152, %v1163
      %v1189 = vmul.f32 %v1153, %v1163
      %v1190 = vmul.f32 %v1154, %v1163
      %v1191 = vmul.f32 %v1155, %v1163
      %v1192 = vmul.f32 %v1156, %v1163
      %v1193 = vmul.f32 %v1157, %v1163
      %v1194 = vmul.f32 %v1158, %v1163
      %v1195 = vmul.f32 %v1159, %v1163
      %v1196 = vadd.f32 %v1164, 0.0
      %v1197 = vadd.f32 %v1165, 0.0
      %v1198 = vadd.f32 %v1166, 0.0
      %v1199 = vadd.f32 %v1167, 0.0
      %v1200 = vadd.f32 %v1168, 0.0
      %v1201 = vadd.f32 %v1169, 0.0
      %v1202 = vadd.f32 %v1170, 0.0
      %v1203 = vadd.f32 %v1171, 0.0
      %v1204 = vadd.f32 %v1172, 0.0
      %v1205 = vadd.f32 %v1173, 0.0
      %v1206 = vadd.f32 %v1174, 0.0
      %v1207 = vadd.f32 %v1175, 0.0
      %v1208 = vadd.f32 %v1176, 0.0
      %v1209 = vadd.f32 %v1177, 0.0
      %v1210 = vadd.f32 %v1178, 0.0
      %v1211 = vadd.f32 %v1179, 0.0
      %v1212 = vadd.f32 %v1180, 0.0
      %v1213 = vadd.f32 %v1181, 0.0
      %v1214 = vadd.f32 %v1182, 0.0
      %v1215 = vadd.f32 %v1183, 0.0
      %v1216 = vadd.f32 %v1184, 0.0
      %v1217 = vadd.f32 %v1185, 0.0
      %v1218 = vadd.f32 %v1186, 0.0
      %v1219 = vadd.f32 %v1187, 0.0
      %v1220 = vadd.f32 %v1188, 0.0
      %v1221 = vadd.f32 %v1189, 0.0
      %v1222 = vadd.f32 %v1190, 0.0
      %v1223 = vadd.f32 %v1191, 0.0
      %v1224 = vadd.f32 %v1192, 0.0
      %v1225 = vadd.f32 %v1193, 0.0
      %v1226 = vadd.f32 %v1194, 0.0
      %v1227 = vadd.f32 %v1195, 0.0
      %v1228 = vld [vmem:[#allocation2 + $0x1] sm:$0xff]
      %v1229 = vld [vmem:[#allocation2 + $0x9] sm:$0xff]
      %v1230 = vld [vmem:[#allocation2 + $0x19] sm:$0xff]
      %v1231 = vld [vmem:[#allocation2 + $0x21] sm:$0xff]
      %v1232 = vld [vmem:[#allocation2 + $0x31] sm:$0xff]
      %v1233 = vld [vmem:[#allocation2 + $0x39] sm:$0xff]
      %v1234 = vld [vmem:[#allocation2 + $0x49] sm:$0xff]
      %v1235 = vld [vmem:[#allocation2 + $0x51] sm:$0xff]
      %v1236 = vld [vmem:[#allocation2 + $0x61] sm:$0xff]
      %v1237 = vld [vmem:[#allocation2 + $0x69] sm:$0xff]
      %v1238 = vld [vmem:[#allocation2 + $0x79] sm:$0xff]
      %v1239 = vld [vmem:[#allocation2 + $0x81] sm:$0xff]
      %v1240 = vld [vmem:[#allocation2 + $0x91] sm:$0xff]
      %v1241 = vld [vmem:[#allocation2 + $0x99] sm:$0xff]
      %v1242 = vld [vmem:[#allocation2 + $0xa9] sm:$0xff]
      %v1243 = vld [vmem:[#allocation2 + $0xb1] sm:$0xff]
      %v1244 = vld [vmem:[#allocation2 + $0xc1] sm:$0xff]
      %v1245 = vld [vmem:[#allocation2 + $0xc9] sm:$0xff]
      %v1246 = vld [vmem:[#allocation2 + $0xd9] sm:$0xff]
      %v1247 = vld [vmem:[#allocation2 + $0xe1] sm:$0xff]
      %v1248 = vld [vmem:[#allocation2 + $0xf1] sm:$0xff]
      %v1249 = vld [vmem:[#allocation2 + $0xf9] sm:$0xff]
      %v1250 = vld [vmem:[#allocation2 + $0x109] sm:$0xff]
      %v1251 = vld [vmem:[#allocation2 + $0x111] sm:$0xff]
      %v1252 = vld [vmem:[#allocation2 + $0x121] sm:$0xff]
      %v1253 = vld [vmem:[#allocation2 + $0x129] sm:$0xff]
      %v1254 = vld [vmem:[#allocation2 + $0x139] sm:$0xff]
      %v1255 = vld [vmem:[#allocation2 + $0x141] sm:$0xff]
      %v1256 = vld [vmem:[#allocation2 + $0x151] sm:$0xff]
      %v1257 = vld [vmem:[#allocation2 + $0x159] sm:$0xff]
      %v1258 = vld [vmem:[#allocation2 + $0x169] sm:$0xff]
      %v1259 = vld [vmem:[#allocation2 + $0x171] sm:$0xff]
      %v1260 = vlaneseq
      %v1261 = vshrl.u32 %v1260, 7
      %v1262 = vsub.s32 1, %v1261
      %v1263 = vrot.slane %v1125, %v1262
      %v1264 = vmul.f32 %v1228, %v1263
      %v1265 = vmul.f32 %v1229, %v1263
      %v1266 = vmul.f32 %v1230, %v1263
      %v1267 = vmul.f32 %v1231, %v1263
      %v1268 = vmul.f32 %v1232, %v1263
      %v1269 = vmul.f32 %v1233, %v1263
      %v1270 = vmul.f32 %v1234, %v1263
      %v1271 = vmul.f32 %v1235, %v1263
      %v1272 = vmul.f32 %v1236, %v1263
      %v1273 = vmul.f32 %v1237, %v1263
      %v1274 = vmul.f32 %v1238, %v1263
      %v1275 = vmul.f32 %v1239, %v1263
      %v1276 = vmul.f32 %v1240, %v1263
      %v1277 = vmul.f32 %v1241, %v1263
      %v1278 = vmul.f32 %v1242, %v1263
      %v1279 = vmul.f32 %v1243, %v1263
      %v1280 = vmul.f32 %v1244, %v1263
      %v1281 = vmul.f32 %v1245, %v1263
      %v1282 = vmul.f32 %v1246, %v1263
      %v1283 = vmul.f32 %v1247, %v1263
      %v1284 = vmul.f32 %v1248, %v1263
      %v1285 = vmul.f32 %v1249, %v1263
      %v1286 = vmul.f32 %v1250, %v1263
      %v1287 = vmul.f32 %v1251, %v1263
      %v1288 = vmul.f32 %v1252, %v1263
      %v1289 = vmul.f32 %v1253, %v1263
      %v1290 = vmul.f32 %v1254, %v1263
      %v1291 = vmul.f32 %v1255, %v1263
      %v1292 = vmul.f32 %v1256, %v1263
      %v1293 = vmul.f32 %v1257, %v1263
      %v1294 = vmul.f32 %v1258, %v1263
      %v1295 = vmul.f32 %v1259, %v1263
      %v1296 = vadd.f32 %v1196, %v1264
      %v1297 = vadd.f32 %v1197, %v1265
      %v1298 = vadd.f32 %v1198, %v1266
      %v1299 = vadd.f32 %v1199, %v1267
      %v1300 = vadd.f32 %v1200, %v1268
      %v1301 = vadd.f32 %v1201, %v1269
      %v1302 = vadd.f32 %v1202, %v1270
      %v1303 = vadd.f32 %v1203, %v1271
      %v1304 = vadd.f32 %v1204, %v1272
      %v1305 = vadd.f32 %v1205, %v1273
      %v1306 = vadd.f32 %v1206, %v1274
      %v1307 = vadd.f32 %v1207, %v1275
      %v1308 = vadd.f32 %v1208, %v1276
      %v1309 = vadd.f32 %v1209, %v1277
      %v1310 = vadd.f32 %v1210, %v1278
      %v1311 = vadd.f32 %v1211, %v1279
      %v1312 = vadd.f32 %v1212, %v1280
      %v1313 = vadd.f32 %v1213, %v1281
      %v1314 = vadd.f32 %v1214, %v1282
      %v1315 = vadd.f32 %v1215, %v1283
      %v1316 = vadd.f32 %v1216, %v1284
      %v1317 = vadd.f32 %v1217, %v1285
      %v1318 = vadd.f32 %v1218, %v1286
      %v1319 = vadd.f32 %v1219, %v1287
      %v1320 = vadd.f32 %v1220, %v1288
      %v1321 = vadd.f32 %v1221, %v1289
      %v1322 = vadd.f32 %v1222, %v1290
      %v1323 = vadd.f32 %v1223, %v1291
      %v1324 = vadd.f32 %v1224, %v1292
      %v1325 = vadd.f32 %v1225, %v1293
      %v1326 = vadd.f32 %v1226, %v1294
      %v1327 = vadd.f32 %v1227, %v1295
      %v1328 = vld [vmem:[#allocation2 + $0x2] sm:$0xff]
      %v1329 = vld [vmem:[#allocation2 + $0xa] sm:$0xff]
      %v1330 = vld [vmem:[#allocation2 + $0x1a] sm:$0xff]
      %v1331 = vld [vmem:[#allocation2 + $0x22] sm:$0xff]
      %v1332 = vld [vmem:[#allocation2 + $0x32] sm:$0xff]
      %v1333 = vld [vmem:[#allocation2 + $0x3a] sm:$0xff]
      %v1334 = vld [vmem:[#allocation2 + $0x4a] sm:$0xff]
      %v1335 = vld [vmem:[#allocation2 + $0x52] sm:$0xff]
      %v1336 = vld [vmem:[#allocation2 + $0x62] sm:$0xff]
      %v1337 = vld [vmem:[#allocation2 + $0x6a] sm:$0xff]
      %v1338 = vld [vmem:[#allocation2 + $0x7a] sm:$0xff]
      %v1339 = vld [vmem:[#allocation2 + $0x82] sm:$0xff]
      %v1340 = vld [vmem:[#allocation2 + $0x92] sm:$0xff]
      %v1341 = vld [vmem:[#allocation2 + $0x9a] sm:$0xff]
      %v1342 = vld [vmem:[#allocation2 + $0xaa] sm:$0xff]
      %v1343 = vld [vmem:[#allocation2 + $0xb2] sm:$0xff]
      %v1344 = vld [vmem:[#allocation2 + $0xc2] sm:$0xff]
      %v1345 = vld [vmem:[#allocation2 + $0xca] sm:$0xff]
      %v1346 = vld [vmem:[#allocation2 + $0xda] sm:$0xff]
      %v1347 = vld [vmem:[#allocation2 + $0xe2] sm:$0xff]
      %v1348 = vld [vmem:[#allocation2 + $0xf2] sm:$0xff]
      %v1349 = vld [vmem:[#allocation2 + $0xfa] sm:$0xff]
      %v1350 = vld [vmem:[#allocation2 + $0x10a] sm:$0xff]
      %v1351 = vld [vmem:[#allocation2 + $0x112] sm:$0xff]
      %v1352 = vld [vmem:[#allocation2 + $0x122] sm:$0xff]
      %v1353 = vld [vmem:[#allocation2 + $0x12a] sm:$0xff]
      %v1354 = vld [vmem:[#allocation2 + $0x13a] sm:$0xff]
      %v1355 = vld [vmem:[#allocation2 + $0x142] sm:$0xff]
      %v1356 = vld [vmem:[#allocation2 + $0x152] sm:$0xff]
      %v1357 = vld [vmem:[#allocation2 + $0x15a] sm:$0xff]
      %v1358 = vld [vmem:[#allocation2 + $0x16a] sm:$0xff]
      %v1359 = vld [vmem:[#allocation2 + $0x172] sm:$0xff]
      %v1360 = vlaneseq
      %v1361 = vshrl.u32 %v1360, 7
      %v1362 = vsub.s32 2, %v1361
      %v1363 = vrot.slane %v1125, %v1362
      %v1364 = vmul.f32 %v1328, %v1363
      %v1365 = vmul.f32 %v1329, %v1363
      %v1366 = vmul.f32 %v1330, %v1363
      %v1367 = vmul.f32 %v1331, %v1363
      %v1368 = vmul.f32 %v1332, %v1363
      %v1369 = vmul.f32 %v1333, %v1363
      %v1370 = vmul.f32 %v1334, %v1363
      %v1371 = vmul.f32 %v1335, %v1363
      %v1372 = vmul.f32 %v1336, %v1363
      %v1373 = vmul.f32 %v1337, %v1363
      %v1374 = vmul.f32 %v1338, %v1363
      %v1375 = vmul.f32 %v1339, %v1363
      %v1376 = vmul.f32 %v1340, %v1363
      %v1377 = vmul.f32 %v1341, %v1363
      %v1378 = vmul.f32 %v1342, %v1363
      %v1379 = vmul.f32 %v1343, %v1363
      %v1380 = vmul.f32 %v1344, %v1363
      %v1381 = vmul.f32 %v1345, %v1363
      %v1382 = vmul.f32 %v1346, %v1363
      %v1383 = vmul.f32 %v1347, %v1363
      %v1384 = vmul.f32 %v1348, %v1363
      %v1385 = vmul.f32 %v1349, %v1363
      %v1386 = vmul.f32 %v1350, %v1363
      %v1387 = vmul.f32 %v1351, %v1363
      %v1388 = vmul.f32 %v1352, %v1363
      %v1389 = vmul.f32 %v1353, %v1363
      %v1390 = vmul.f32 %v1354, %v1363
      %v1391 = vmul.f32 %v1355, %v1363
      %v1392 = vmul.f32 %v1356, %v1363
      %v1393 = vmul.f32 %v1357, %v1363
      %v1394 = vmul.f32 %v1358, %v1363
      %v1395 = vmul.f32 %v1359, %v1363
      %v1396 = vadd.f32 %v1296, %v1364
      %v1397 = vadd.f32 %v1297, %v1365
      %v1398 = vadd.f32 %v1298, %v1366
      %v1399 = vadd.f32 %v1299, %v1367
      %v1400 = vadd.f32 %v1300, %v1368
      %v1401 = vadd.f32 %v1301, %v1369
      %v1402 = vadd.f32 %v1302, %v1370
      %v1403 = vadd.f32 %v1303, %v1371
      %v1404 = vadd.f32 %v1304, %v1372
      %v1405 = vadd.f32 %v1305, %v1373
      %v1406 = vadd.f32 %v1306, %v1374
      %v1407 = vadd.f32 %v1307, %v1375
      %v1408 = vadd.f32 %v1308, %v1376
      %v1409 = vadd.f32 %v1309, %v1377
      %v1410 = vadd.f32 %v1310, %v1378
      %v1411 = vadd.f32 %v1311, %v1379
      %v1412 = vadd.f32 %v1312, %v1380
      %v1413 = vadd.f32 %v1313, %v1381
      %v1414 = vadd.f32 %v1314, %v1382
      %v1415 = vadd.f32 %v1315, %v1383
      %v1416 = vadd.f32 %v1316, %v1384
      %v1417 = vadd.f32 %v1317, %v1385
      %v1418 = vadd.f32 %v1318, %v1386
      %v1419 = vadd.f32 %v1319, %v1387
      %v1420 = vadd.f32 %v1320, %v1388
      %v1421 = vadd.f32 %v1321, %v1389
      %v1422 = vadd.f32 %v1322, %v1390
      %v1423 = vadd.f32 %v1323, %v1391
      %v1424 = vadd.f32 %v1324, %v1392
      %v1425 = vadd.f32 %v1325, %v1393
      %v1426 = vadd.f32 %v1326, %v1394
      %v1427 = vadd.f32 %v1327, %v1395
      %s1428 = scalar_lea.vmem [#allocation2], 24
      %v1429 = vld [vmem:[%s1428] sm:$0xff]
      %v1430 = vld [vmem:[%s1428 + $0x8] sm:$0xff]
      %v1431 = vld [vmem:[%s1428 + $0x18] sm:$0xff]
      %v1432 = vld [vmem:[%s1428 + $0x20] sm:$0xff]
      %v1433 = vld [vmem:[%s1428 + $0x30] sm:$0xff]
      %v1434 = vld [vmem:[%s1428 + $0x38] sm:$0xff]
      %v1435 = vld [vmem:[%s1428 + $0x48] sm:$0xff]
      %v1436 = vld [vmem:[%s1428 + $0x50] sm:$0xff]
      %v1437 = vld [vmem:[%s1428 + $0x60] sm:$0xff]
      %v1438 = vld [vmem:[%s1428 + $0x68] sm:$0xff]
      %v1439 = vld [vmem:[%s1428 + $0x78] sm:$0xff]
      %v1440 = vld [vmem:[%s1428 + $0x80] sm:$0xff]
      %v1441 = vld [vmem:[%s1428 + $0x90] sm:$0xff]
      %v1442 = vld [vmem:[%s1428 + $0x98] sm:$0xff]
      %v1443 = vld [vmem:[%s1428 + $0xa8] sm:$0xff]
      %v1444 = vld [vmem:[%s1428 + $0xb0] sm:$0xff]
      %v1445 = vld [vmem:[%s1428 + $0xc0] sm:$0xff]
      %v1446 = vld [vmem:[%s1428 + $0xc8] sm:$0xff]
      %v1447 = vld [vmem:[%s1428 + $0xd8] sm:$0xff]
      %v1448 = vld [vmem:[%s1428 + $0xe0] sm:$0xff]
      %v1449 = vld [vmem:[%s1428 + $0xf0] sm:$0xff]
      %v1450 = vld [vmem:[%s1428 + $0xf8] sm:$0xff]
      %v1451 = vld [vmem:[%s1428 + $0x108] sm:$0xff]
      %v1452 = vld [vmem:[%s1428 + $0x110] sm:$0xff]
      %v1453 = vld [vmem:[%s1428 + $0x120] sm:$0xff]
      %v1454 = vld [vmem:[%s1428 + $0x128] sm:$0xff]
      %v1455 = vld [vmem:[%s1428 + $0x138] sm:$0xff]
      %v1456 = vld [vmem:[%s1428 + $0x140] sm:$0xff]
      %v1457 = vld [vmem:[%s1428 + $0x150] sm:$0xff]
      %v1458 = vld [vmem:[%s1428 + $0x158] sm:$0xff]
      %v1459 = vld [vmem:[%s1428 + $0x168] sm:$0xff]
      %v1460 = vld [vmem:[%s1428 + $0x170] sm:$0xff]
      %v1461 = vlaneseq
      %v1462 = vshrl.u32 %v1461, 7
      %v1463 = vsub.s32 0, %v1462
      %v1464 = vrot.slane %v1126, %v1463
      %v1465 = vmul.f32 %v1429, %v1464
      %v1466 = vmul.f32 %v1430, %v1464
      %v1467 = vmul.f32 %v1431, %v1464
      %v1468 = vmul.f32 %v1432, %v1464
      %v1469 = vmul.f32 %v1433, %v1464
      %v1470 = vmul.f32 %v1434, %v1464
      %v1471 = vmul.f32 %v1435, %v1464
      %v1472 = vmul.f32 %v1436, %v1464
      %v1473 = vmul.f32 %v1437, %v1464
      %v1474 = vmul.f32 %v1438, %v1464
      %v1475 = vmul.f32 %v1439, %v1464
      %v1476 = vmul.f32 %v1440, %v1464
      %v1477 = vmul.f32 %v1441, %v1464
      %v1478 = vmul.f32 %v1442, %v1464
      %v1479 = vmul.f32 %v1443, %v1464
      %v1480 = vmul.f32 %v1444, %v1464
      %v1481 = vmul.f32 %v1445, %v1464
      %v1482 = vmul.f32 %v1446, %v1464
      %v1483 = vmul.f32 %v1447, %v1464
      %v1484 = vmul.f32 %v1448, %v1464
      %v1485 = vmul.f32 %v1449, %v1464
      %v1486 = vmul.f32 %v1450, %v1464
      %v1487 = vmul.f32 %v1451, %v1464
      %v1488 = vmul.f32 %v1452, %v1464
      %v1489 = vmul.f32 %v1453, %v1464
      %v1490 = vmul.f32 %v1454, %v1464
      %v1491 = vmul.f32 %v1455, %v1464
      %v1492 = vmul.f32 %v1456, %v1464
      %v1493 = vmul.f32 %v1457, %v1464
      %v1494 = vmul.f32 %v1458, %v1464
      %v1495 = vmul.f32 %v1459, %v1464
      %v1496 = vmul.f32 %v1460, %v1464
      %v1497 = vadd.f32 %v1396, %v1465
      %v1498 = vadd.f32 %v1397, %v1466
      %v1499 = vadd.f32 %v1398, %v1467
      %v1500 = vadd.f32 %v1399, %v1468
      %v1501 = vadd.f32 %v1400, %v1469
      %v1502 = vadd.f32 %v1401, %v1470
      %v1503 = vadd.f32 %v1402, %v1471
      %v1504 = vadd.f32 %v1403, %v1472
      %v1505 = vadd.f32 %v1404, %v1473
      %v1506 = vadd.f32 %v1405, %v1474
      %v1507 = vadd.f32 %v1406, %v1475
      %v1508 = vadd.f32 %v1407, %v1476
      %v1509 = vadd.f32 %v1408, %v1477
      %v1510 = vadd.f32 %v1409, %v1478
      %v1511 = vadd.f32 %v1410, %v1479
      %v1512 = vadd.f32 %v1411, %v1480
      %v1513 = vadd.f32 %v1412, %v1481
      %v1514 = vadd.f32 %v1413, %v1482
      %v1515 = vadd.f32 %v1414, %v1483
      %v1516 = vadd.f32 %v1415, %v1484
      %v1517 = vadd.f32 %v1416, %v1485
      %v1518 = vadd.f32 %v1417, %v1486
      %v1519 = vadd.f32 %v1418, %v1487
      %v1520 = vadd.f32 %v1419, %v1488
      %v1521 = vadd.f32 %v1420, %v1489
      %v1522 = vadd.f32 %v1421, %v1490
      %v1523 = vadd.f32 %v1422, %v1491
      %v1524 = vadd.f32 %v1423, %v1492
      %v1525 = vadd.f32 %v1424, %v1493
      %v1526 = vadd.f32 %v1425, %v1494
      %v1527 = vadd.f32 %v1426, %v1495
      %v1528 = vadd.f32 %v1427, %v1496
      %v1529 = vld [vmem:[%s1428 + $0x1] sm:$0xff]
      %v1530 = vld [vmem:[%s1428 + $0x9] sm:$0xff]
      %v1531 = vld [vmem:[%s1428 + $0x19] sm:$0xff]
      %v1532 = vld [vmem:[%s1428 + $0x21] sm:$0xff]
      %v1533 = vld [vmem:[%s1428 + $0x31] sm:$0xff]
      %v1534 = vld [vmem:[%s1428 + $0x39] sm:$0xff]
      %v1535 = vld [vmem:[%s1428 + $0x49] sm:$0xff]
      %v1536 = vld [vmem:[%s1428 + $0x51] sm:$0xff]
      %v1537 = vld [vmem:[%s1428 + $0x61] sm:$0xff]
      %v1538 = vld [vmem:[%s1428 + $0x69] sm:$0xff]
      %v1539 = vld [vmem:[%s1428 + $0x79] sm:$0xff]
      %v1540 = vld [vmem:[%s1428 + $0x81] sm:$0xff]
      %v1541 = vld [vmem:[%s1428 + $0x91] sm:$0xff]
      %v1542 = vld [vmem:[%s1428 + $0x99] sm:$0xff]
      %v1543 = vld [vmem:[%s1428 + $0xa9] sm:$0xff]
      %v1544 = vld [vmem:[%s1428 + $0xb1] sm:$0xff]
      %v1545 = vld [vmem:[%s1428 + $0xc1] sm:$0xff]
      %v1546 = vld [vmem:[%s1428 + $0xc9] sm:$0xff]
      %v1547 = vld [vmem:[%s1428 + $0xd9] sm:$0xff]
      %v1548 = vld [vmem:[%s1428 + $0xe1] sm:$0xff]
      %v1549 = vld [vmem:[%s1428 + $0xf1] sm:$0xff]
      %v1550 = vld [vmem:[%s1428 + $0xf9] sm:$0xff]
      %v1551 = vld [vmem:[%s1428 + $0x109] sm:$0xff]
      %v1552 = vld [vmem:[%s1428 + $0x111] sm:$0xff]
      %v1553 = vld [vmem:[%s1428 + $0x121] sm:$0xff]
      %v1554 = vld [vmem:[%s1428 + $0x129] sm:$0xff]
      %v1555 = vld [vmem:[%s1428 + $0x139] sm:$0xff]
      %v1556 = vld [vmem:[%s1428 + $0x141] sm:$0xff]
      %v1557 = vld [vmem:[%s1428 + $0x151] sm:$0xff]
      %v1558 = vld [vmem:[%s1428 + $0x159] sm:$0xff]
      %v1559 = vld [vmem:[%s1428 + $0x169] sm:$0xff]
      %v1560 = vld [vmem:[%s1428 + $0x171] sm:$0xff]
      %v1561 = vlaneseq
      %v1562 = vshrl.u32 %v1561, 7
      %v1563 = vsub.s32 1, %v1562
      %v1564 = vrot.slane %v1126, %v1563
      %v1565 = vmul.f32 %v1529, %v1564
      %v1566 = vmul.f32 %v1530, %v1564
      %v1567 = vmul.f32 %v1531, %v1564
      %v1568 = vmul.f32 %v1532, %v1564
      %v1569 = vmul.f32 %v1533, %v1564
      %v1570 = vmul.f32 %v1534, %v1564
      %v1571 = vmul.f32 %v1535, %v1564
      %v1572 = vmul.f32 %v1536, %v1564
      %v1573 = vmul.f32 %v1537, %v1564
      %v1574 = vmul.f32 %v1538, %v1564
      %v1575 = vmul.f32 %v1539, %v1564
      %v1576 = vmul.f32 %v1540, %v1564
      %v1577 = vmul.f32 %v1541, %v1564
      %v1578 = vmul.f32 %v1542, %v1564
      %v1579 = vmul.f32 %v1543, %v1564
      %v1580 = vmul.f32 %v1544, %v1564
      %v1581 = vmul.f32 %v1545, %v1564
      %v1582 = vmul.f32 %v1546, %v1564
      %v1583 = vmul.f32 %v1547, %v1564
      %v1584 = vmul.f32 %v1548, %v1564
      %v1585 = vmul.f32 %v1549, %v1564
      %v1586 = vmul.f32 %v1550, %v1564
      %v1587 = vmul.f32 %v1551, %v1564
      %v1588 = vmul.f32 %v1552, %v1564
      %v1589 = vmul.f32 %v1553, %v1564
      %v1590 = vmul.f32 %v1554, %v1564
      %v1591 = vmul.f32 %v1555, %v1564
      %v1592 = vmul.f32 %v1556, %v1564
      %v1593 = vmul.f32 %v1557, %v1564
      %v1594 = vmul.f32 %v1558, %v1564
      %v1595 = vmul.f32 %v1559, %v1564
      %v1596 = vmul.f32 %v1560, %v1564
      %v1597 = vadd.f32 %v1497, %v1565
      %v1598 = vadd.f32 %v1498, %v1566
      %v1599 = vadd.f32 %v1499, %v1567
      %v1600 = vadd.f32 %v1500, %v1568
      %v1601 = vadd.f32 %v1501, %v1569
      %v1602 = vadd.f32 %v1502, %v1570
      %v1603 = vadd.f32 %v1503, %v1571
      %v1604 = vadd.f32 %v1504, %v1572
      %v1605 = vadd.f32 %v1505, %v1573
      %v1606 = vadd.f32 %v1506, %v1574
      %v1607 = vadd.f32 %v1507, %v1575
      %v1608 = vadd.f32 %v1508, %v1576
      %v1609 = vadd.f32 %v1509, %v1577
      %v1610 = vadd.f32 %v1510, %v1578
      %v1611 = vadd.f32 %v1511, %v1579
      %v1612 = vadd.f32 %v1512, %v1580
      %v1613 = vadd.f32 %v1513, %v1581
      %v1614 = vadd.f32 %v1514, %v1582
      %v1615 = vadd.f32 %v1515, %v1583
      %v1616 = vadd.f32 %v1516, %v1584
      %v1617 = vadd.f32 %v1517, %v1585
      %v1618 = vadd.f32 %v1518, %v1586
      %v1619 = vadd.f32 %v1519, %v1587
      %v1620 = vadd.f32 %v1520, %v1588
      %v1621 = vadd.f32 %v1521, %v1589
      %v1622 = vadd.f32 %v1522, %v1590
      %v1623 = vadd.f32 %v1523, %v1591
      %v1624 = vadd.f32 %v1524, %v1592
      %v1625 = vadd.f32 %v1525, %v1593
      %v1626 = vadd.f32 %v1526, %v1594
      %v1627 = vadd.f32 %v1527, %v1595
      %v1628 = vadd.f32 %v1528, %v1596
      %v1629 = vld [vmem:[%s1428 + $0x2] sm:$0xff]
      %v1630 = vld [vmem:[%s1428 + $0xa] sm:$0xff]
      %v1631 = vld [vmem:[%s1428 + $0x1a] sm:$0xff]
      %v1632 = vld [vmem:[%s1428 + $0x22] sm:$0xff]
      %v1633 = vld [vmem:[%s1428 + $0x32] sm:$0xff]
      %v1634 = vld [vmem:[%s1428 + $0x3a] sm:$0xff]
      %v1635 = vld [vmem:[%s1428 + $0x4a] sm:$0xff]
      %v1636 = vld [vmem:[%s1428 + $0x52] sm:$0xff]
      %v1637 = vld [vmem:[%s1428 + $0x62] sm:$0xff]
      %v1638 = vld [vmem:[%s1428 + $0x6a] sm:$0xff]
      %v1639 = vld [vmem:[%s1428 + $0x7a] sm:$0xff]
      %v1640 = vld [vmem:[%s1428 + $0x82] sm:$0xff]
      %v1641 = vld [vmem:[%s1428 + $0x92] sm:$0xff]
      %v1642 = vld [vmem:[%s1428 + $0x9a] sm:$0xff]
      %v1643 = vld [vmem:[%s1428 + $0xaa] sm:$0xff]
      %v1644 = vld [vmem:[%s1428 + $0xb2] sm:$0xff]
      %v1645 = vld [vmem:[%s1428 + $0xc2] sm:$0xff]
      %v1646 = vld [vmem:[%s1428 + $0xca] sm:$0xff]
      %v1647 = vld [vmem:[%s1428 + $0xda] sm:$0xff]
      %v1648 = vld [vmem:[%s1428 + $0xe2] sm:$0xff]
      %v1649 = vld [vmem:[%s1428 + $0xf2] sm:$0xff]
      %v1650 = vld [vmem:[%s1428 + $0xfa] sm:$0xff]
      %v1651 = vld [vmem:[%s1428 + $0x10a] sm:$0xff]
      %v1652 = vld [vmem:[%s1428 + $0x112] sm:$0xff]
      %v1653 = vld [vmem:[%s1428 + $0x122] sm:$0xff]
      %v1654 = vld [vmem:[%s1428 + $0x12a] sm:$0xff]
      %v1655 = vld [vmem:[%s1428 + $0x13a] sm:$0xff]
      %v1656 = vld [vmem:[%s1428 + $0x142] sm:$0xff]
      %v1657 = vld [vmem:[%s1428 + $0x152] sm:$0xff]
      %v1658 = vld [vmem:[%s1428 + $0x15a] sm:$0xff]
      %v1659 = vld [vmem:[%s1428 + $0x16a] sm:$0xff]
      %v1660 = vld [vmem:[%s1428 + $0x172] sm:$0xff]
      %v1661 = vlaneseq
      %v1662 = vshrl.u32 %v1661, 7
      %v1663 = vsub.s32 2, %v1662
      %v1664 = vrot.slane %v1126, %v1663
      %v1665 = vmul.f32 %v1629, %v1664
      %v1666 = vmul.f32 %v1630, %v1664
      %v1667 = vmul.f32 %v1631, %v1664
      %v1668 = vmul.f32 %v1632, %v1664
      %v1669 = vmul.f32 %v1633, %v1664
      %v1670 = vmul.f32 %v1634, %v1664
      %v1671 = vmul.f32 %v1635, %v1664
      %v1672 = vmul.f32 %v1636, %v1664
      %v1673 = vmul.f32 %v1637, %v1664
      %v1674 = vmul.f32 %v1638, %v1664
      %v1675 = vmul.f32 %v1639, %v1664
      %v1676 = vmul.f32 %v1640, %v1664
      %v1677 = vmul.f32 %v1641, %v1664
      %v1678 = vmul.f32 %v1642, %v1664
      %v1679 = vmul.f32 %v1643, %v1664
      %v1680 = vmul.f32 %v1644, %v1664
      %v1681 = vmul.f32 %v1645, %v1664
      %v1682 = vmul.f32 %v1646, %v1664
      %v1683 = vmul.f32 %v1647, %v1664
      %v1684 = vmul.f32 %v1648, %v1664
      %v1685 = vmul.f32 %v1649, %v1664
      %v1686 = vmul.f32 %v1650, %v1664
      %v1687 = vmul.f32 %v1651, %v1664
      %v1688 = vmul.f32 %v1652, %v1664
      %v1689 = vmul.f32 %v1653, %v1664
      %v1690 = vmul.f32 %v1654, %v1664
      %v1691 = vmul.f32 %v1655, %v1664
      %v1692 = vmul.f32 %v1656, %v1664
      %v1693 = vmul.f32 %v1657, %v1664
      %v1694 = vmul.f32 %v1658, %v1664
      %v1695 = vmul.f32 %v1659, %v1664
      %v1696 = vmul.f32 %v1660, %v1664
      %v1697 = vadd.f32 %v1597, %v1665
      %v1698 = vadd.f32 %v1598, %v1666
      %v1699 = vadd.f32 %v1599, %v1667
      %v1700 = vadd.f32 %v1600, %v1668
      %v1701 = vadd.f32 %v1601, %v1669
      %v1702 = vadd.f32 %v1602, %v1670
      %v1703 = vadd.f32 %v1603, %v1671
      %v1704 = vadd.f32 %v1604, %v1672
      %v1705 = vadd.f32 %v1605, %v1673
      %v1706 = vadd.f32 %v1606, %v1674
      %v1707 = vadd.f32 %v1607, %v1675
      %v1708 = vadd.f32 %v1608, %v1676
      %v1709 = vadd.f32 %v1609, %v1677
      %v1710 = vadd.f32 %v1610, %v1678
      %v1711 = vadd.f32 %v1611, %v1679
      %v1712 = vadd.f32 %v1612, %v1680
      %v1713 = vadd.f32 %v1613, %v1681
      %v1714 = vadd.f32 %v1614, %v1682
      %v1715 = vadd.f32 %v1615, %v1683
      %v1716 = vadd.f32 %v1616, %v1684
      %v1717 = vadd.f32 %v1617, %v1685
      %v1718 = vadd.f32 %v1618, %v1686
      %v1719 = vadd.f32 %v1619, %v1687
      %v1720 = vadd.f32 %v1620, %v1688
      %v1721 = vadd.f32 %v1621, %v1689
      %v1722 = vadd.f32 %v1622, %v1690
      %v1723 = vadd.f32 %v1623, %v1691
      %v1724 = vadd.f32 %v1624, %v1692
      %v1725 = vadd.f32 %v1625, %v1693
      %v1726 = vadd.f32 %v1626, %v1694
      %v1727 = vadd.f32 %v1627, %v1695
      %v1728 = vadd.f32 %v1628, %v1696
      %s1729 = scalar_lea.vmem [#allocation2], 48
      %v1730 = vld [vmem:[%s1729] sm:$0xff]
      %v1731 = vld [vmem:[%s1729 + $0x8] sm:$0xff]
      %v1732 = vld [vmem:[%s1729 + $0x18] sm:$0xff]
      %v1733 = vld [vmem:[%s1729 + $0x20] sm:$0xff]
      %v1734 = vld [vmem:[%s1729 + $0x30] sm:$0xff]
      %v1735 = vld [vmem:[%s1729 + $0x38] sm:$0xff]
      %v1736 = vld [vmem:[%s1729 + $0x48] sm:$0xff]
      %v1737 = vld [vmem:[%s1729 + $0x50] sm:$0xff]
      %v1738 = vld [vmem:[%s1729 + $0x60] sm:$0xff]
      %v1739 = vld [vmem:[%s1729 + $0x68] sm:$0xff]
      %v1740 = vld [vmem:[%s1729 + $0x78] sm:$0xff]
      %v1741 = vld [vmem:[%s1729 + $0x80] sm:$0xff]
      %v1742 = vld [vmem:[%s1729 + $0x90] sm:$0xff]
      %v1743 = vld [vmem:[%s1729 + $0x98] sm:$0xff]
      %v1744 = vld [vmem:[%s1729 + $0xa8] sm:$0xff]
      %v1745 = vld [vmem:[%s1729 + $0xb0] sm:$0xff]
      %v1746 = vld [vmem:[%s1729 + $0xc0] sm:$0xff]
      %v1747 = vld [vmem:[%s1729 + $0xc8] sm:$0xff]
      %v1748 = vld [vmem:[%s1729 + $0xd8] sm:$0xff]
      %v1749 = vld [vmem:[%s1729 + $0xe0] sm:$0xff]
      %v1750 = vld [vmem:[%s1729 + $0xf0] sm:$0xff]
      %v1751 = vld [vmem:[%s1729 + $0xf8] sm:$0xff]
      %v1752 = vld [vmem:[%s1729 + $0x108] sm:$0xff]
      %v1753 = vld [vmem:[%s1729 + $0x110] sm:$0xff]
      %v1754 = vld [vmem:[%s1729 + $0x120] sm:$0xff]
      %v1755 = vld [vmem:[%s1729 + $0x128] sm:$0xff]
      %v1756 = vld [vmem:[%s1729 + $0x138] sm:$0xff]
      %v1757 = vld [vmem:[%s1729 + $0x140] sm:$0xff]
      %v1758 = vld [vmem:[%s1729 + $0x150] sm:$0xff]
      %v1759 = vld [vmem:[%s1729 + $0x158] sm:$0xff]
      %v1760 = vld [vmem:[%s1729 + $0x168] sm:$0xff]
      %v1761 = vld [vmem:[%s1729 + $0x170] sm:$0xff]
      %v1762 = vlaneseq
      %v1763 = vshrl.u32 %v1762, 7
      %v1764 = vsub.s32 0, %v1763
      %v1765 = vrot.slane %v1127, %v1764
      %v1766 = vmul.f32 %v1730, %v1765
      %v1767 = vmul.f32 %v1731, %v1765
      %v1768 = vmul.f32 %v1732, %v1765
      %v1769 = vmul.f32 %v1733, %v1765
      %v1770 = vmul.f32 %v1734, %v1765
      %v1771 = vmul.f32 %v1735, %v1765
      %v1772 = vmul.f32 %v1736, %v1765
      %v1773 = vmul.f32 %v1737, %v1765
      %v1774 = vmul.f32 %v1738, %v1765
      %v1775 = vmul.f32 %v1739, %v1765
      %v1776 = vmul.f32 %v1740, %v1765
      %v1777 = vmul.f32 %v1741, %v1765
      %v1778 = vmul.f32 %v1742, %v1765
      %v1779 = vmul.f32 %v1743, %v1765
      %v1780 = vmul.f32 %v1744, %v1765
      %v1781 = vmul.f32 %v1745, %v1765
      %v1782 = vmul.f32 %v1746, %v1765
      %v1783 = vmul.f32 %v1747, %v1765
      %v1784 = vmul.f32 %v1748, %v1765
      %v1785 = vmul.f32 %v1749, %v1765
      %v1786 = vmul.f32 %v1750, %v1765
      %v1787 = vmul.f32 %v1751, %v1765
      %v1788 = vmul.f32 %v1752, %v1765
      %v1789 = vmul.f32 %v1753, %v1765
      %v1790 = vmul.f32 %v1754, %v1765
      %v1791 = vmul.f32 %v1755, %v1765
      %v1792 = vmul.f32 %v1756, %v1765
      %v1793 = vmul.f32 %v1757, %v1765
      %v1794 = vmul.f32 %v1758, %v1765
      %v1795 = vmul.f32 %v1759, %v1765
      %v1796 = vmul.f32 %v1760, %v1765
      %v1797 = vmul.f32 %v1761, %v1765
      %v1798 = vadd.f32 %v1697, %v1766
      %v1799 = vadd.f32 %v1698, %v1767
      %v1800 = vadd.f32 %v1699, %v1768
      %v1801 = vadd.f32 %v1700, %v1769
      %v1802 = vadd.f32 %v1701, %v1770
      %v1803 = vadd.f32 %v1702, %v1771
      %v1804 = vadd.f32 %v1703, %v1772
      %v1805 = vadd.f32 %v1704, %v1773
      %v1806 = vadd.f32 %v1705, %v1774
      %v1807 = vadd.f32 %v1706, %v1775
      %v1808 = vadd.f32 %v1707, %v1776
      %v1809 = vadd.f32 %v1708, %v1777
      %v1810 = vadd.f32 %v1709, %v1778
      %v1811 = vadd.f32 %v1710, %v1779
      %v1812 = vadd.f32 %v1711, %v1780
      %v1813 = vadd.f32 %v1712, %v1781
      %v1814 = vadd.f32 %v1713, %v1782
      %v1815 = vadd.f32 %v1714, %v1783
      %v1816 = vadd.f32 %v1715, %v1784
      %v1817 = vadd.f32 %v1716, %v1785
      %v1818 = vadd.f32 %v1717, %v1786
      %v1819 = vadd.f32 %v1718, %v1787
      %v1820 = vadd.f32 %v1719, %v1788
      %v1821 = vadd.f32 %v1720, %v1789
      %v1822 = vadd.f32 %v1721, %v1790
      %v1823 = vadd.f32 %v1722, %v1791
      %v1824 = vadd.f32 %v1723, %v1792
      %v1825 = vadd.f32 %v1724, %v1793
      %v1826 = vadd.f32 %v1725, %v1794
      %v1827 = vadd.f32 %v1726, %v1795
      %v1828 = vadd.f32 %v1727, %v1796
      %v1829 = vadd.f32 %v1728, %v1797
      %v1830 = vld [vmem:[%s1729 + $0x1] sm:$0xff]
      %v1831 = vld [vmem:[%s1729 + $0x9] sm:$0xff]
      %v1832 = vld [vmem:[%s1729 + $0x19] sm:$0xff]
      %v1833 = vld [vmem:[%s1729 + $0x21] sm:$0xff]
      %v1834 = vld [vmem:[%s1729 + $0x31] sm:$0xff]
      %v1835 = vld [vmem:[%s1729 + $0x39] sm:$0xff]
      %v1836 = vld [vmem:[%s1729 + $0x49] sm:$0xff]
      %v1837 = vld [vmem:[%s1729 + $0x51] sm:$0xff]
      %v1838 = vld [vmem:[%s1729 + $0x61] sm:$0xff]
      %v1839 = vld [vmem:[%s1729 + $0x69] sm:$0xff]
      %v1840 = vld [vmem:[%s1729 + $0x79] sm:$0xff]
      %v1841 = vld [vmem:[%s1729 + $0x81] sm:$0xff]
      %v1842 = vld [vmem:[%s1729 + $0x91] sm:$0xff]
      %v1843 = vld [vmem:[%s1729 + $0x99] sm:$0xff]
      %v1844 = vld [vmem:[%s1729 + $0xa9] sm:$0xff]
      %v1845 = vld [vmem:[%s1729 + $0xb1] sm:$0xff]
      %v1846 = vld [vmem:[%s1729 + $0xc1] sm:$0xff]
      %v1847 = vld [vmem:[%s1729 + $0xc9] sm:$0xff]
      %v1848 = vld [vmem:[%s1729 + $0xd9] sm:$0xff]
      %v1849 = vld [vmem:[%s1729 + $0xe1] sm:$0xff]
      %v1850 = vld [vmem:[%s1729 + $0xf1] sm:$0xff]
      %v1851 = vld [vmem:[%s1729 + $0xf9] sm:$0xff]
      %v1852 = vld [vmem:[%s1729 + $0x109] sm:$0xff]
      %v1853 = vld [vmem:[%s1729 + $0x111] sm:$0xff]
      %v1854 = vld [vmem:[%s1729 + $0x121] sm:$0xff]
      %v1855 = vld [vmem:[%s1729 + $0x129] sm:$0xff]
      %v1856 = vld [vmem:[%s1729 + $0x139] sm:$0xff]
      %v1857 = vld [vmem:[%s1729 + $0x141] sm:$0xff]
      %v1858 = vld [vmem:[%s1729 + $0x151] sm:$0xff]
      %v1859 = vld [vmem:[%s1729 + $0x159] sm:$0xff]
      %v1860 = vld [vmem:[%s1729 + $0x169] sm:$0xff]
      %v1861 = vld [vmem:[%s1729 + $0x171] sm:$0xff]
      %v1862 = vlaneseq
      %v1863 = vshrl.u32 %v1862, 7
      %v1864 = vsub.s32 1, %v1863
      %v1865 = vrot.slane %v1127, %v1864
      %v1866 = vmul.f32 %v1830, %v1865
      %v1867 = vmul.f32 %v1831, %v1865
      %v1868 = vmul.f32 %v1832, %v1865
      %v1869 = vmul.f32 %v1833, %v1865
      %v1870 = vmul.f32 %v1834, %v1865
      %v1871 = vmul.f32 %v1835, %v1865
      %v1872 = vmul.f32 %v1836, %v1865
      %v1873 = vmul.f32 %v1837, %v1865
      %v1874 = vmul.f32 %v1838, %v1865
      %v1875 = vmul.f32 %v1839, %v1865
      %v1876 = vmul.f32 %v1840, %v1865
      %v1877 = vmul.f32 %v1841, %v1865
      %v1878 = vmul.f32 %v1842, %v1865
      %v1879 = vmul.f32 %v1843, %v1865
      %v1880 = vmul.f32 %v1844, %v1865
      %v1881 = vmul.f32 %v1845, %v1865
      %v1882 = vmul.f32 %v1846, %v1865
      %v1883 = vmul.f32 %v1847, %v1865
      %v1884 = vmul.f32 %v1848, %v1865
      %v1885 = vmul.f32 %v1849, %v1865
      %v1886 = vmul.f32 %v1850, %v1865
      %v1887 = vmul.f32 %v1851, %v1865
      %v1888 = vmul.f32 %v1852, %v1865
      %v1889 = vmul.f32 %v1853, %v1865
      %v1890 = vmul.f32 %v1854, %v1865
      %v1891 = vmul.f32 %v1855, %v1865
      %v1892 = vmul.f32 %v1856, %v1865
      %v1893 = vmul.f32 %v1857, %v1865
      %v1894 = vmul.f32 %v1858, %v1865
      %v1895 = vmul.f32 %v1859, %v1865
      %v1896 = vmul.f32 %v1860, %v1865
      %v1897 = vmul.f32 %v1861, %v1865
      %v1898 = vadd.f32 %v1798, %v1866
      %v1899 = vadd.f32 %v1799, %v1867
      %v1900 = vadd.f32 %v1800, %v1868
      %v1901 = vadd.f32 %v1801, %v1869
      %v1902 = vadd.f32 %v1802, %v1870
      %v1903 = vadd.f32 %v1803, %v1871
      %v1904 = vadd.f32 %v1804, %v1872
      %v1905 = vadd.f32 %v1805, %v1873
      %v1906 = vadd.f32 %v1806, %v1874
      %v1907 = vadd.f32 %v1807, %v1875
      %v1908 = vadd.f32 %v1808, %v1876
      %v1909 = vadd.f32 %v1809, %v1877
      %v1910 = vadd.f32 %v1810, %v1878
      %v1911 = vadd.f32 %v1811, %v1879
      %v1912 = vadd.f32 %v1812, %v1880
      %v1913 = vadd.f32 %v1813, %v1881
      %v1914 = vadd.f32 %v1814, %v1882
      %v1915 = vadd.f32 %v1815, %v1883
      %v1916 = vadd.f32 %v1816, %v1884
      %v1917 = vadd.f32 %v1817, %v1885
      %v1918 = vadd.f32 %v1818, %v1886
      %v1919 = vadd.f32 %v1819, %v1887
      %v1920 = vadd.f32 %v1820, %v1888
      %v1921 = vadd.f32 %v1821, %v1889
      %v1922 = vadd.f32 %v1822, %v1890
      %v1923 = vadd.f32 %v1823, %v1891
      %v1924 = vadd.f32 %v1824, %v1892
      %v1925 = vadd.f32 %v1825, %v1893
      %v1926 = vadd.f32 %v1826, %v1894
      %v1927 = vadd.f32 %v1827, %v1895
      %v1928 = vadd.f32 %v1828, %v1896
      %v1929 = vadd.f32 %v1829, %v1897
      %v1930 = vld [vmem:[%s1729 + $0x2] sm:$0xff]
      %v1931 = vld [vmem:[%s1729 + $0xa] sm:$0xff]
      %v1932 = vld [vmem:[%s1729 + $0x1a] sm:$0xff]
      %v1933 = vld [vmem:[%s1729 + $0x22] sm:$0xff]
      %v1934 = vld [vmem:[%s1729 + $0x32] sm:$0xff]
      %v1935 = vld [vmem:[%s1729 + $0x3a] sm:$0xff]
      %v1936 = vld [vmem:[%s1729 + $0x4a] sm:$0xff]
      %v1937 = vld [vmem:[%s1729 + $0x52] sm:$0xff]
      %v1938 = vld [vmem:[%s1729 + $0x62] sm:$0xff]
      %v1939 = vld [vmem:[%s1729 + $0x6a] sm:$0xff]
      %v1940 = vld [vmem:[%s1729 + $0x7a] sm:$0xff]
      %v1941 = vld [vmem:[%s1729 + $0x82] sm:$0xff]
      %v1942 = vld [vmem:[%s1729 + $0x92] sm:$0xff]
      %v1943 = vld [vmem:[%s1729 + $0x9a] sm:$0xff]
      %v1944 = vld [vmem:[%s1729 + $0xaa] sm:$0xff]
      %v1945 = vld [vmem:[%s1729 + $0xb2] sm:$0xff]
      %v1946 = vld [vmem:[%s1729 + $0xc2] sm:$0xff]
      %v1947 = vld [vmem:[%s1729 + $0xca] sm:$0xff]
      %v1948 = vld [vmem:[%s1729 + $0xda] sm:$0xff]
      %v1949 = vld [vmem:[%s1729 + $0xe2] sm:$0xff]
      %v1950 = vld [vmem:[%s1729 + $0xf2] sm:$0xff]
      %v1951 = vld [vmem:[%s1729 + $0xfa] sm:$0xff]
      %v1952 = vld [vmem:[%s1729 + $0x10a] sm:$0xff]
      %v1953 = vld [vmem:[%s1729 + $0x112] sm:$0xff]
      %v1954 = vld [vmem:[%s1729 + $0x122] sm:$0xff]
      %v1955 = vld [vmem:[%s1729 + $0x12a] sm:$0xff]
      %v1956 = vld [vmem:[%s1729 + $0x13a] sm:$0xff]
      %v1957 = vld [vmem:[%s1729 + $0x142] sm:$0xff]
      %v1958 = vld [vmem:[%s1729 + $0x152] sm:$0xff]
      %v1959 = vld [vmem:[%s1729 + $0x15a] sm:$0xff]
      %v1960 = vld [vmem:[%s1729 + $0x16a] sm:$0xff]
      %v1961 = vld [vmem:[%s1729 + $0x172] sm:$0xff]
      %v1962 = vlaneseq
      %v1963 = vshrl.u32 %v1962, 7
      %v1964 = vsub.s32 2, %v1963
      %v1965 = vrot.slane %v1127, %v1964
      %v1966 = vmul.f32 %v1930, %v1965
      %v1967 = vmul.f32 %v1931, %v1965
      %v1968 = vmul.f32 %v1932, %v1965
      %v1969 = vmul.f32 %v1933, %v1965
      %v1970 = vmul.f32 %v1934, %v1965
      %v1971 = vmul.f32 %v1935, %v1965
      %v1972 = vmul.f32 %v1936, %v1965
      %v1973 = vmul.f32 %v1937, %v1965
      %v1974 = vmul.f32 %v1938, %v1965
      %v1975 = vmul.f32 %v1939, %v1965
      %v1976 = vmul.f32 %v1940, %v1965
      %v1977 = vmul.f32 %v1941, %v1965
      %v1978 = vmul.f32 %v1942, %v1965
      %v1979 = vmul.f32 %v1943, %v1965
      %v1980 = vmul.f32 %v1944, %v1965
      %v1981 = vmul.f32 %v1945, %v1965
      %v1982 = vmul.f32 %v1946, %v1965
      %v1983 = vmul.f32 %v1947, %v1965
      %v1984 = vmul.f32 %v1948, %v1965
      %v1985 = vmul.f32 %v1949, %v1965
      %v1986 = vmul.f32 %v1950, %v1965
      %v1987 = vmul.f32 %v1951, %v1965
      %v1988 = vmul.f32 %v1952, %v1965
      %v1989 = vmul.f32 %v1953, %v1965
      %v1990 = vmul.f32 %v1954, %v1965
      %v1991 = vmul.f32 %v1955, %v1965
      %v1992 = vmul.f32 %v1956, %v1965
      %v1993 = vmul.f32 %v1957, %v1965
      %v1994 = vmul.f32 %v1958, %v1965
      %v1995 = vmul.f32 %v1959, %v1965
      %v1996 = vmul.f32 %v1960, %v1965
      %v1997 = vmul.f32 %v1961, %v1965
      %v1998 = vadd.f32 %v1898, %v1966
      %v1999 = vadd.f32 %v1899, %v1967
      %v2000 = vadd.f32 %v1900, %v1968
      %v2001 = vadd.f32 %v1901, %v1969
      %v2002 = vadd.f32 %v1902, %v1970
      %v2003 = vadd.f32 %v1903, %v1971
      %v2004 = vadd.f32 %v1904, %v1972
      %v2005 = vadd.f32 %v1905, %v1973
      %v2006 = vadd.f32 %v1906, %v1974
      %v2007 = vadd.f32 %v1907, %v1975
      %v2008 = vadd.f32 %v1908, %v1976
      %v2009 = vadd.f32 %v1909, %v1977
      %v2010 = vadd.f32 %v1910, %v1978
      %v2011 = vadd.f32 %v1911, %v1979
      %v2012 = vadd.f32 %v1912, %v1980
      %v2013 = vadd.f32 %v1913, %v1981
      %v2014 = vadd.f32 %v1914, %v1982
      %v2015 = vadd.f32 %v1915, %v1983
      %v2016 = vadd.f32 %v1916, %v1984
      %v2017 = vadd.f32 %v1917, %v1985
      %v2018 = vadd.f32 %v1918, %v1986
      %v2019 = vadd.f32 %v1919, %v1987
      %v2020 = vadd.f32 %v1920, %v1988
      %v2021 = vadd.f32 %v1921, %v1989
      %v2022 = vadd.f32 %v1922, %v1990
      %v2023 = vadd.f32 %v1923, %v1991
      %v2024 = vadd.f32 %v1924, %v1992
      %v2025 = vadd.f32 %v1925, %v1993
      %v2026 = vadd.f32 %v1926, %v1994
      %v2027 = vadd.f32 %v1927, %v1995
      %v2028 = vadd.f32 %v1928, %v1996
      %v2029 = vadd.f32 %v1929, %v1997
      %v2030 = vld [vmem:[%s4] sm:$0x1]
      %v2032 = vlaneseq
      %v2033 = vshrl.u32 %v2032, 7
      %v2034 = vsub.s32 0, %v2033
      %v2035 = vrot.slane %v2030, %v2034
      %v2037 = vadd.f32 %v1998, %v2035
      %v2038 = vadd.f32 %v1999, %v2035
      %v2039 = vadd.f32 %v2000, %v2035
      %v2040 = vadd.f32 %v2001, %v2035
      %v2041 = vadd.f32 %v2002, %v2035
      %v2042 = vadd.f32 %v2003, %v2035
      %v2043 = vadd.f32 %v2004, %v2035
      %v2044 = vadd.f32 %v2005, %v2035
      %v2045 = vadd.f32 %v2006, %v2035
      %v2046 = vadd.f32 %v2007, %v2035
      %v2047 = vadd.f32 %v2008, %v2035
      %v2048 = vadd.f32 %v2009, %v2035
      %v2049 = vadd.f32 %v2010, %v2035
      %v2050 = vadd.f32 %v2011, %v2035
      %v2051 = vadd.f32 %v2012, %v2035
      %v2052 = vadd.f32 %v2013, %v2035
      %v2053 = vadd.f32 %v2014, %v2035
      %v2054 = vadd.f32 %v2015, %v2035
      %v2055 = vadd.f32 %v2016, %v2035
      %v2056 = vadd.f32 %v2017, %v2035
      %v2057 = vadd.f32 %v2018, %v2035
      %v2058 = vadd.f32 %v2019, %v2035
      %v2059 = vadd.f32 %v2020, %v2035
      %v2060 = vadd.f32 %v2021, %v2035
      %v2061 = vadd.f32 %v2022, %v2035
      %v2062 = vadd.f32 %v2023, %v2035
      %v2063 = vadd.f32 %v2024, %v2035
      %v2064 = vadd.f32 %v2025, %v2035
      %v2065 = vadd.f32 %v2026, %v2035
      %v2066 = vadd.f32 %v2027, %v2035
      %v2067 = vadd.f32 %v2028, %v2035
      %v2068 = vadd.f32 %v2029, %v2035
      %v2069 = vmax.f32 %v2037, 0.0
      %v2070 = vmax.f32 %v2038, 0.0
      %v2071 = vmax.f32 %v2039, 0.0
      %v2072 = vmax.f32 %v2040, 0.0
      %v2073 = vmax.f32 %v2041, 0.0
      %v2074 = vmax.f32 %v2042, 0.0
      %v2075 = vmax.f32 %v2043, 0.0
      %v2076 = vmax.f32 %v2044, 0.0
      %v2077 = vmax.f32 %v2045, 0.0
      %v2078 = vmax.f32 %v2046, 0.0
      %v2079 = vmax.f32 %v2047, 0.0
      %v2080 = vmax.f32 %v2048, 0.0
      %v2081 = vmax.f32 %v2049, 0.0
      %v2082 = vmax.f32 %v2050, 0.0
      %v2083 = vmax.f32 %v2051, 0.0
      %v2084 = vmax.f32 %v2052, 0.0
      %v2085 = vmax.f32 %v2053, 0.0
      %v2086 = vmax.f32 %v2054, 0.0
      %v2087 = vmax.f32 %v2055, 0.0
      %v2088 = vmax.f32 %v2056, 0.0
      %v2089 = vmax.f32 %v2057, 0.0
      %v2090 = vmax.f32 %v2058, 0.0
      %v2091 = vmax.f32 %v2059, 0.0
      %v2092 = vmax.f32 %v2060, 0.0
      %v2093 = vmax.f32 %v2061, 0.0
      %v2094 = vmax.f32 %v2062, 0.0
      %v2095 = vmax.f32 %v2063, 0.0
      %v2096 = vmax.f32 %v2064, 0.0
      %v2097 = vmax.f32 %v2065, 0.0
      %v2098 = vmax.f32 %v2066, 0.0
      %v2099 = vmax.f32 %v2067, 0.0
      %v2100 = vmax.f32 %v2068, 0.0
      %v2101 = vmin.f32 %v2069, 6.0
      %v2102 = vmin.f32 %v2070, 6.0
      %v2103 = vmin.f32 %v2071, 6.0
      %v2104 = vmin.f32 %v2072, 6.0
      %v2105 = vmin.f32 %v2073, 6.0
      %v2106 = vmin.f32 %v2074, 6.0
      %v2107 = vmin.f32 %v2075, 6.0
      %v2108 = vmin.f32 %v2076, 6.0
      %v2109 = vmin.f32 %v2077, 6.0
      %v2110 = vmin.f32 %v2078, 6.0
      %v2111 = vmin.f32 %v2079, 6.0
      %v2112 = vmin.f32 %v2080, 6.0
      %v2113 = vmin.f32 %v2081, 6.0
      %v2114 = vmin.f32 %v2082, 6.0
      %v2115 = vmin.f32 %v2083, 6.0
      %v2116 = vmin.f32 %v2084, 6.0
      %v2117 = vmin.f32 %v2085, 6.0
      %v2118 = vmin.f32 %v2086, 6.0
      %v2119 = vmin.f32 %v2087, 6.0
      %v2120 = vmin.f32 %v2088, 6.0
      %v2121 = vmin.f32 %v2089, 6.0
      %v2122 = vmin.f32 %v2090, 6.0
      %v2123 = vmin.f32 %v2091, 6.0
      %v2124 = vmin.f32 %v2092, 6.0
      %v2125 = vmin.f32 %v2093, 6.0
      %v2126 = vmin.f32 %v2094, 6.0
      %v2127 = vmin.f32 %v2095, 6.0
      %v2128 = vmin.f32 %v2096, 6.0
      %v2129 = vmin.f32 %v2097, 6.0
      %v2130 = vmin.f32 %v2098, 6.0
      %v2131 = vmin.f32 %v2099, 6.0
      %v2132 = vmin.f32 %v2100, 6.0
      %v2133 = vld [vmem:[%s5] sm:$0xff]
      %v2134 = vld [vmem:[%s5 + $0x8] sm:$0xff]
      %v2135 = vld [vmem:[%s5 + $0x10] sm:$0xff]
      %v2136 = vld [vmem:[%s5 + $0x18] sm:$0xff]
      %v2137 = vld [vmem:[%s5 + $0x20] sm:$0xff]
      %v2138 = vld [vmem:[%s5 + $0x28] sm:$0xff]
      %v2139 = vld [vmem:[%s5 + $0x30] sm:$0xff]
      %v2140 = vld [vmem:[%s5 + $0x38] sm:$0xff]
      %v2141 = vld [vmem:[%s5 + $0x40] sm:$0xff]
      %v2142 = vld [vmem:[%s5 + $0x48] sm:$0xff]
      %v2143 = vld [vmem:[%s5 + $0x50] sm:$0xff]
      %v2144 = vld [vmem:[%s5 + $0x58] sm:$0xff]
      %v2145 = vld [vmem:[%s5 + $0x60] sm:$0xff]
      %v2146 = vld [vmem:[%s5 + $0x68] sm:$0xff]
      %v2147 = vld [vmem:[%s5 + $0x70] sm:$0xff]
      %v2148 = vld [vmem:[%s5 + $0x78] sm:$0xff]
      %v2149 = vld [vmem:[%s6] sm:$0x1]
      %v2151 = vlaneseq
      %v2152 = vshrl.u32 %v2151, 7
      %v2153 = vsub.s32 0, %v2152
      %v2154 = vrot.slane %v2149, %v2153
      %2156 = vmatprep.subr.mxu0 0.0
      %2157 = vmatpush1.msra.mxu0 %v2133
      %2158 = vmatprep.subr.mxu0 0.0
      %2159 = vmatpush1.msra.mxu0 %v2134
      %2160 = vmatprep.subr.mxu0 0.0
      %2161 = vmatpush1.msra.mxu0 %v2135
      %2162 = vmatprep.subr.mxu0 0.0
      %2163 = vmatpush1.msra.mxu0 %v2136
      %2164 = vmatprep.subr.mxu0 0.0
      %2165 = vmatpush1.msra.mxu0 %v2137
      %2166 = vmatprep.subr.mxu0 0.0
      %2167 = vmatpush1.msra.mxu0 %v2138
      %2168 = vmatprep.subr.mxu0 0.0
      %2169 = vmatpush1.msra.mxu0 %v2139
      %2170 = vmatprep.subr.mxu0 0.0
      %2171 = vmatpush1.msra.mxu0 %v2140
      %2172 = vmatprep.subr.mxu0 0.0
      %2173 = vmatpush1.msra.mxu0 %v2141
      %2174 = vmatprep.subr.mxu0 0.0
      %2175 = vmatpush1.msra.mxu0 %v2142
      %2176 = vmatprep.subr.mxu0 0.0
      %2177 = vmatpush1.msra.mxu0 %v2143
      %2178 = vmatprep.subr.mxu0 0.0
      %2179 = vmatpush1.msra.mxu0 %v2144
      %2180 = vmatprep.subr.mxu0 0.0
      %2181 = vmatpush1.msra.mxu0 %v2145
      %2182 = vmatprep.subr.mxu0 0.0
      %2183 = vmatpush1.msra.mxu0 %v2146
      %2184 = vmatprep.subr.mxu0 0.0
      %2185 = vmatpush1.msra.mxu0 %v2147
      %2186 = vmatprep.subr.mxu0 0.0
      %2187 = vmatpush1.msra.mxu0 %v2148
      %2188 = vmatprep.subr.mxu0 0.0
      %2189 = vmatpush1.msra.mxu0 0.0
      %2190 = vmatprep.subr.mxu0 0.0
      %2191 = vmatpush1.msra.mxu0 0.0
      %2192 = vmatprep.subr.mxu0 0.0
      %2193 = vmatpush1.msra.mxu0 0.0
      %2194 = vmatprep.subr.mxu0 0.0
      %2195 = vmatpush1.msra.mxu0 0.0
      %2196 = vmatprep.subr.mxu0 0.0
      %2197 = vmatpush1.msra.mxu0 0.0
      %2198 = vmatprep.subr.mxu0 0.0
      %2199 = vmatpush1.msra.mxu0 0.0
      %2200 = vmatprep.subr.mxu0 0.0
      %2201 = vmatpush1.msra.mxu0 0.0
      %2202 = vmatprep.subr.mxu0 0.0
      %2203 = vmatpush1.msra.mxu0 0.0
      %2204 = vmatprep.subr.mxu0 0.0
      %2205 = vmatpush1.msra.mxu0 0.0
      %2206 = vmatprep.subr.mxu0 0.0
      %2207 = vmatpush1.msra.mxu0 0.0
      %2208 = vmatprep.subr.mxu0 0.0
      %2209 = vmatpush1.msra.mxu0 0.0
      %2210 = vmatprep.subr.mxu0 0.0
      %2211 = vmatpush1.msra.mxu0 0.0
      %2212 = vmatprep.subr.mxu0 0.0
      %2213 = vmatpush1.msra.mxu0 0.0
      %2214 = vmatprep.subr.mxu0 0.0
      %2215 = vmatpush1.msra.mxu0 0.0
      %2216 = vmatprep.subr.mxu0 0.0
      %2217 = vmatpush1.msra.mxu0 0.0
      %2218 = vmatprep.subr.mxu0 0.0
      %2219 = vmatpush1.msra.mxu0 0.0
      %2220 = vmatprep.mubr.f32.mxu0 0.0
      %2221 = vmatmul.mubr.f32.gmra.mrb[0].mxu0 %v2101
      %v2222 = vpop.f32.mrb[0].mxu0
      %v2223 = vadd.f32 %v2154, %v2222
      %v2224 = vpop.f32.mrb[0].mxu0
      %2225 = vmatprep.mubr.f32.mxu0 0.0
      %2226 = vmatmul.mubr.f32.gmra.mrb[0].mxu0 %v2102
      %v2227 = vpop.f32.mrb[0].mxu0
      %v2228 = vadd.f32 %v2154, %v2227
      %v2229 = vpop.f32.mrb[0].mxu0
      %2230 = vmatprep.mubr.f32.mxu0 0.0
      %2231 = vmatmul.mubr.f32.gmra.mrb[0].mxu0 %v2103
      %v2232 = vpop.f32.mrb[0].mxu0
      %v2233 = vadd.f32 %v2154, %v2232
      %v2234 = vpop.f32.mrb[0].mxu0
      %2235 = vmatprep.mubr.f32.mxu0 0.0
      %2236 = vmatmul.mubr.f32.gmra.mrb[0].mxu0 %v2104
      %v2237 = vpop.f32.mrb[0].mxu0
      %v2238 = vadd.f32 %v2154, %v2237
      %v2239 = vpop.f32.mrb[0].mxu0
      %2240 = vmatprep.mubr.f32.mxu0 0.0
      %2241 = vmatmul.mubr.f32.gmra.mrb[0].mxu0 %v2105
      %v2242 = vpop.f32.mrb[0].mxu0
      %v2243 = vadd.f32 %v2154, %v2242
      %v2244 = vpop.f32.mrb[0].mxu0
      %2245 = vmatprep.mubr.f32.mxu0 0.0
      %2246 = vmatmul.mubr.f32.gmra.mrb[0].mxu0 %v2106
      %v2247 = vpop.f32.mrb[0].mxu0
      %v2248 = vadd.f32 %v2154, %v2247
      %v2249 = vpop.f32.mrb[0].mxu0
      %2250 = vmatprep.mubr.f32.mxu0 0.0
      %2251 = vmatmul.mubr.f32.gmra.mrb[0].mxu0 %v2107
      %v2252 = vpop.f32.mrb[0].mxu0
      %v2253 = vadd.f32 %v2154, %v2252
      %v2254 = vpop.f32.mrb[0].mxu0
      %2255 = vmatprep.mubr.f32.mxu0 0.0
      %2256 = vmatmul.mubr.f32.gmra.mrb[0].mxu0 %v2108
      %v2257 = vpop.f32.mrb[0].mxu0
      %v2258 = vadd.f32 %v2154, %v2257
      %v2259 = vpop.f32.mrb[0].mxu0
      %2260 = vmatprep.mubr.f32.mxu0 0.0
      %2261 = vmatmul.mubr.f32.gmra.mrb[0].mxu0 %v2109
      %v2262 = vpop.f32.mrb[0].mxu0
      %v2263 = vadd.f32 %v2154, %v2262
      %v2264 = vpop.f32.mrb[0].mxu0
      %2265 = vmatprep.mubr.f32.mxu0 0.0
      %2266 = vmatmul.mubr.f32.gmra.mrb[0].mxu0 %v2110
      %v2267 = vpop.f32.mrb[0].mxu0
      %v2268 = vadd.f32 %v2154, %v2267
      %v2269 = vpop.f32.mrb[0].mxu0
      %2270 = vmatprep.mubr.f32.mxu0 0.0
      %2271 = vmatmul.mubr.f32.gmra.mrb[0].mxu0 %v2111
      %v2272 = vpop.f32.mrb[0].mxu0
      %v2273 = vadd.f32 %v2154, %v2272
      %v2274 = vpop.f32.mrb[0].mxu0
      %2275 = vmatprep.mubr.f32.mxu0 0.0
      %2276 = vmatmul.mubr.f32.gmra.mrb[0].mxu0 %v2112
      %v2277 = vpop.f32.mrb[0].mxu0
      %v2278 = vadd.f32 %v2154, %v2277
      %v2279 = vpop.f32.mrb[0].mxu0
      %2280 = vmatprep.mubr.f32.mxu0 0.0
      %2281 = vmatmul.mubr.f32.gmra.mrb[0].mxu0 %v2113
      %v2282 = vpop.f32.mrb[0].mxu0
      %v2283 = vadd.f32 %v2154, %v2282
      %v2284 = vpop.f32.mrb[0].mxu0
      %2285 = vmatprep.mubr.f32.mxu0 0.0
      %2286 = vmatmul.mubr.f32.gmra.mrb[0].mxu0 %v2114
      %v2287 = vpop.f32.mrb[0].mxu0
      %v2288 = vadd.f32 %v2154, %v2287
      %v2289 = vpop.f32.mrb[0].mxu0
      %2290 = vmatprep.mubr.f32.mxu0 0.0
      %2291 = vmatmul.mubr.f32.gmra.mrb[0].mxu0 %v2115
      %v2292 = vpop.f32.mrb[0].mxu0
      %v2293 = vadd.f32 %v2154, %v2292
      %v2294 = vpop.f32.mrb[0].mxu0
      %2295 = vmatprep.mubr.f32.mxu0 0.0
      %2296 = vmatmul.mubr.f32.gmra.mrb[0].mxu0 %v2116
      %v2297 = vpop.f32.mrb[0].mxu0
      %v2298 = vadd.f32 %v2154, %v2297
      %v2299 = vpop.f32.mrb[0].mxu0
      %2300 = vmatprep.mubr.f32.mxu0 0.0
      %2301 = vmatmul.mubr.f32.gmra.mrb[0].mxu0 %v2117
      %v2302 = vpop.f32.mrb[0].mxu0
      %v2303 = vadd.f32 %v2154, %v2302
      %v2304 = vpop.f32.mrb[0].mxu0
      %2305 = vmatprep.mubr.f32.mxu0 0.0
      %2306 = vmatmul.mubr.f32.gmra.mrb[0].mxu0 %v2118
      %v2307 = vpop.f32.mrb[0].mxu0
      %v2308 = vadd.f32 %v2154, %v2307
      %v2309 = vpop.f32.mrb[0].mxu0
      %2310 = vmatprep.mubr.f32.mxu0 0.0
      %2311 = vmatmul.mubr.f32.gmra.mrb[0].mxu0 %v2119
      %v2312 = vpop.f32.mrb[0].mxu0
      %v2313 = vadd.f32 %v2154, %v2312
      %v2314 = vpop.f32.mrb[0].mxu0
      %2315 = vmatprep.mubr.f32.mxu0 0.0
      %2316 = vmatmul.mubr.f32.gmra.mrb[0].mxu0 %v2120
      %v2317 = vpop.f32.mrb[0].mxu0
      %v2318 = vadd.f32 %v2154, %v2317
      %v2319 = vpop.f32.mrb[0].mxu0
      %2320 = vmatprep.mubr.f32.mxu0 0.0
      %2321 = vmatmul.mubr.f32.gmra.mrb[0].mxu0 %v2121
      %v2322 = vpop.f32.mrb[0].mxu0
      %v2323 = vadd.f32 %v2154, %v2322
      %v2324 = vpop.f32.mrb[0].mxu0
      %2325 = vmatprep.mubr.f32.mxu0 0.0
      %2326 = vmatmul.mubr.f32.gmra.mrb[0].mxu0 %v2122
      %v2327 = vpop.f32.mrb[0].mxu0
      %v2328 = vadd.f32 %v2154, %v2327
      %v2329 = vpop.f32.mrb[0].mxu0
      %2330 = vmatprep.mubr.f32.mxu0 0.0
      %2331 = vmatmul.mubr.f32.gmra.mrb[0].mxu0 %v2123
      %v2332 = vpop.f32.mrb[0].mxu0
      %v2333 = vadd.f32 %v2154, %v2332
      %v2334 = vpop.f32.mrb[0].mxu0
      %2335 = vmatprep.mubr.f32.mxu0 0.0
      %2336 = vmatmul.mubr.f32.gmra.mrb[0].mxu0 %v2124
      %v2337 = vpop.f32.mrb[0].mxu0
      %v2338 = vadd.f32 %v2154, %v2337
      %v2339 = vpop.f32.mrb[0].mxu0
      %2340 = vmatprep.mubr.f32.mxu0 0.0
      %2341 = vmatmul.mubr.f32.gmra.mrb[0].mxu0 %v2125
      %v2342 = vpop.f32.mrb[0].mxu0
      %v2343 = vadd.f32 %v2154, %v2342
      %v2344 = vpop.f32.mrb[0].mxu0
      %2345 = vmatprep.mubr.f32.mxu0 0.0
      %2346 = vmatmul.mubr.f32.gmra.mrb[0].mxu0 %v2126
      %v2347 = vpop.f32.mrb[0].mxu0
      %v2348 = vadd.f32 %v2154, %v2347
      %v2349 = vpop.f32.mrb[0].mxu0
      %2350 = vmatprep.mubr.f32.mxu0 0.0
      %2351 = vmatmul.mubr.f32.gmra.mrb[0].mxu0 %v2127
      %v2352 = vpop.f32.mrb[0].mxu0
      %v2353 = vadd.f32 %v2154, %v2352
      %v2354 = vpop.f32.mrb[0].mxu0
      %2355 = vmatprep.mubr.f32.mxu0 0.0
      %2356 = vmatmul.mubr.f32.gmra.mrb[0].mxu0 %v2128
      %v2357 = vpop.f32.mrb[0].mxu0
      %v2358 = vadd.f32 %v2154, %v2357
      %v2359 = vpop.f32.mrb[0].mxu0
      %2360 = vmatprep.mubr.f32.mxu0 0.0
      %2361 = vmatmul.mubr.f32.gmra.mrb[0].mxu0 %v2129
      %v2362 = vpop.f32.mrb[0].mxu0
      %v2363 = vadd.f32 %v2154, %v2362
      %v2364 = vpop.f32.mrb[0].mxu0
      %2365 = vmatprep.mubr.f32.mxu0 0.0
      %2366 = vmatmul.mubr.f32.gmra.mrb[0].mxu0 %v2130
      %v2367 = vpop.f32.mrb[0].mxu0
      %v2368 = vadd.f32 %v2154, %v2367
      %v2369 = vpop.f32.mrb[0].mxu0
      %2370 = vmatprep.mubr.f32.mxu0 0.0
      %2371 = vmatmul.mubr.f32.gmra.mrb[0].mxu0 %v2131
      %v2372 = vpop.f32.mrb[0].mxu0
      %v2373 = vadd.f32 %v2154, %v2372
      %v2374 = vpop.f32.mrb[0].mxu0
      %2375 = vmatprep.mubr.f32.mxu0 0.0
      %2376 = vmatmul.mubr.f32.gmra.mrb[0].mxu0 %v2132
      %v2377 = vpop.f32.mrb[0].mxu0
      %v2378 = vadd.f32 %v2154, %v2377
      %v2379 = vpop.f32.mrb[0].mxu0
      %2380 = vdwg.mxu0
      %s2381 = sadd.s32 %s304, 1
      %s2382 = smul.u32 %s2381, 24
      %s2383 = scalar_lea.vmem %s292, %s2382
      %v2384 = vld [vmem:[%s2383 + $0x1] sm:$0xff]
      %v2385 = vld [vmem:[%s2383 + $0x9] sm:$0xff]
      %v2386 = vld [vmem:[%s2383 + $0x19] sm:$0xff]
      %v2387 = vld [vmem:[%s2383 + $0x21] sm:$0xff]
      %v2388 = vld [vmem:[%s2383 + $0x31] sm:$0xff]
      %v2389 = vld [vmem:[%s2383 + $0x39] sm:$0xff]
      %v2390 = vld [vmem:[%s2383 + $0x49] sm:$0xff]
      %v2391 = vld [vmem:[%s2383 + $0x51] sm:$0xff]
      %v2392 = vld [vmem:[%s2383 + $0x61] sm:$0xff]
      %v2393 = vld [vmem:[%s2383 + $0x69] sm:$0xff]
      %v2394 = vld [vmem:[%s2383 + $0x79] sm:$0xff]
      %v2395 = vld [vmem:[%s2383 + $0x81] sm:$0xff]
      %v2396 = vld [vmem:[%s2383 + $0x91] sm:$0xff]
      %v2397 = vld [vmem:[%s2383 + $0x99] sm:$0xff]
      %v2398 = vld [vmem:[%s2383 + $0xa9] sm:$0xff]
      %v2399 = vld [vmem:[%s2383 + $0xb1] sm:$0xff]
      %v2400 = vld [vmem:[%s2383 + $0xc1] sm:$0xff]
      %v2401 = vld [vmem:[%s2383 + $0xc9] sm:$0xff]
      %v2402 = vld [vmem:[%s2383 + $0xd9] sm:$0xff]
      %v2403 = vld [vmem:[%s2383 + $0xe1] sm:$0xff]
      %v2404 = vld [vmem:[%s2383 + $0xf1] sm:$0xff]
      %v2405 = vld [vmem:[%s2383 + $0xf9] sm:$0xff]
      %v2406 = vld [vmem:[%s2383 + $0x109] sm:$0xff]
      %v2407 = vld [vmem:[%s2383 + $0x111] sm:$0xff]
      %v2408 = vld [vmem:[%s2383 + $0x121] sm:$0xff]
      %v2409 = vld [vmem:[%s2383 + $0x129] sm:$0xff]
      %v2410 = vld [vmem:[%s2383 + $0x139] sm:$0xff]
      %v2411 = vld [vmem:[%s2383 + $0x141] sm:$0xff]
      %v2412 = vld [vmem:[%s2383 + $0x151] sm:$0xff]
      %v2413 = vld [vmem:[%s2383 + $0x159] sm:$0xff]
      %v2414 = vld [vmem:[%s2383 + $0x169] sm:$0xff]
      %v2415 = vld [vmem:[%s2383 + $0x171] sm:$0xff]
      %v2416 = vadd.f32 %v2223, %v2384
      %v2417 = vadd.f32 %v2228, %v2385
      %v2418 = vadd.f32 %v2233, %v2386
      %v2419 = vadd.f32 %v2238, %v2387
      %v2420 = vadd.f32 %v2243, %v2388
      %v2421 = vadd.f32 %v2248, %v2389
      %v2422 = vadd.f32 %v2253, %v2390
      %v2423 = vadd.f32 %v2258, %v2391
      %v2424 = vadd.f32 %v2263, %v2392
      %v2425 = vadd.f32 %v2268, %v2393
      %v2426 = vadd.f32 %v2273, %v2394
      %v2427 = vadd.f32 %v2278, %v2395
      %v2428 = vadd.f32 %v2283, %v2396
      %v2429 = vadd.f32 %v2288, %v2397
      %v2430 = vadd.f32 %v2293, %v2398
      %v2431 = vadd.f32 %v2298, %v2399
      %v2432 = vadd.f32 %v2303, %v2400
      %v2433 = vadd.f32 %v2308, %v2401
      %v2434 = vadd.f32 %v2313, %v2402
      %v2435 = vadd.f32 %v2318, %v2403
      %v2436 = vadd.f32 %v2323, %v2404
      %v2437 = vadd.f32 %v2328, %v2405
      %v2438 = vadd.f32 %v2333, %v2406
      %v2439 = vadd.f32 %v2338, %v2407
      %v2440 = vadd.f32 %v2343, %v2408
      %v2441 = vadd.f32 %v2348, %v2409
      %v2442 = vadd.f32 %v2353, %v2410
      %v2443 = vadd.f32 %v2358, %v2411
      %v2444 = vadd.f32 %v2363, %v2412
      %v2445 = vadd.f32 %v2368, %v2413
      %v2446 = vadd.f32 %v2373, %v2414
      %v2447 = vadd.f32 %v2378, %v2415
      %2448 = vst [vmem:[%s302] sm:$0xff] %v2416
      %2449 = vst [vmem:[%s302 + $0x8] sm:$0xff] %v2417
      %2450 = vst [vmem:[%s302 + $0x10] sm:$0xff] %v2418
      %2451 = vst [vmem:[%s302 + $0x18] sm:$0xff] %v2419
      %2452 = vst [vmem:[%s302 + $0x20] sm:$0xff] %v2420
      %2453 = vst [vmem:[%s302 + $0x28] sm:$0xff] %v2421
      %2454 = vst [vmem:[%s302 + $0x30] sm:$0xff] %v2422
      %2455 = vst [vmem:[%s302 + $0x38] sm:$0xff] %v2423
      %2456 = vst [vmem:[%s302 + $0x40] sm:$0xff] %v2424
      %2457 = vst [vmem:[%s302 + $0x48] sm:$0xff] %v2425
      %2458 = vst [vmem:[%s302 + $0x50] sm:$0xff] %v2426
      %2459 = vst [vmem:[%s302 + $0x58] sm:$0xff] %v2427
      %2460 = vst [vmem:[%s302 + $0x60] sm:$0xff] %v2428
      %2461 = vst [vmem:[%s302 + $0x68] sm:$0xff] %v2429
      %2462 = vst [vmem:[%s302 + $0x70] sm:$0xff] %v2430
      %2463 = vst [vmem:[%s302 + $0x78] sm:$0xff] %v2431
      %2464 = vst [vmem:[%s302 + $0x80] sm:$0xff] %v2432
      %2465 = vst [vmem:[%s302 + $0x88] sm:$0xff] %v2433
      %2466 = vst [vmem:[%s302 + $0x90] sm:$0xff] %v2434
      %2467 = vst [vmem:[%s302 + $0x98] sm:$0xff] %v2435
      %2468 = vst [vmem:[%s302 + $0xa0] sm:$0xff] %v2436
      %2469 = vst [vmem:[%s302 + $0xa8] sm:$0xff] %v2437
      %2470 = vst [vmem:[%s302 + $0xb0] sm:$0xff] %v2438
      %2471 = vst [vmem:[%s302 + $0xb8] sm:$0xff] %v2439
      %2472 = vst [vmem:[%s302 + $0xc0] sm:$0xff] %v2440
      %2473 = vst [vmem:[%s302 + $0xc8] sm:$0xff] %v2441
      %2474 = vst [vmem:[%s302 + $0xd0] sm:$0xff] %v2442
      %2475 = vst [vmem:[%s302 + $0xd8] sm:$0xff] %v2443
      %2476 = vst [vmem:[%s302 + $0xe0] sm:$0xff] %v2444
      %2477 = vst [vmem:[%s302 + $0xe8] sm:$0xff] %v2445
      %2478 = vst [vmem:[%s302 + $0xf0] sm:$0xff] %v2446
      %2479 = vst [vmem:[%s302 + $0xf8] sm:$0xff] %v2447
      %s2480 = smul.u32 16, %s23
      %p2481 = scmp.lt.s32.totalorder %s22, 1
      %s2482 = scalar_select %p2481, %s22, 1
      %p2483 = scmp.lt.s32.totalorder %s2480, 15
      %s2484 = scalar_select %p2483, %s2480, 15
      %s2485 = smul.addr %s2484, 2
      %s2486 = smul.addr %s2482, 32
      %s2487 = sadd.s32 %s2485, %s2486
      %s2488 = smul.addr %s2487, 8
      %s2489 = scalar_lea.vmem %s7, %s2488
      // Predicated region
      $region49: #{inverted_residual_forward.1} parent=47 // pred_check
        %p2490 = pneg %p202
      $region50: #{inverted_residual_forward.1} parent=47 // pred_check_branch
        %2492 = sbr.rel (%p2490) target = $region52
      $region51: #{inverted_residual_forward.1} parent=47 // pred_region
        %s2493 = smul.u32 16, %s23
      $region52: #{inverted_residual_forward.1} parent=47 // pred_fallthru
        _
    $region48: #{inverted_residual_forward.1} parent=5 // pred_fallthru
      _
    %p2494 = scmp.le.s32.totalorder 2, %s13
    // Predicated region
    $region53: #{inverted_residual_forward.1} parent=5 // pred_check
      %p2495 = pneg %p2494
    $region54: #{inverted_residual_forward.1} parent=5 // pred_check_branch
      %2497 = sbr.rel (%p2495) target = $region56
    $region55: #{inverted_residual_forward.1} parent=5 // pred_region
      %s2498 = ssub.s32 %s13, 2
      // Predicated region
      $region57: #{inverted_residual_forward.1} parent=55 // pred_check
        %p2499 = pneg %p208
      $region58: #{inverted_residual_forward.1} parent=55 // pred_check_branch
        %2501 = sbr.rel (%p2499) target = $region60
      $region59: #{inverted_residual_forward.1} parent=55 // pred_region
        %s2502 = smul.u32 16, %s25
        %p2503 = scmp.lt.s32.totalorder %s24, 1
        %s2504 = scalar_select %p2503, %s24, 1
        %p2505 = scmp.lt.s32.totalorder %s2502, 15
        %s2506 = scalar_select %p2505, %s2502, 15
        %s2507 = smul.addr %s2506, 2
        %s2508 = smul.addr %s2504, 32
        %s2509 = sadd.s32 %s2507, %s2508
        %s2510 = smul.addr %s2509, 8
        %s2511 = scalar_lea.vmem %s7, %s2510
      $region60: #{inverted_residual_forward.1} parent=55 // pred_fallthru
        _
    $region56: #{inverted_residual_forward.1} parent=5 // pred_fallthru
      _
  $region6: #{inverted_residual_forward.1} parent=0 // loop_footer
    %s17 = sadd.s32 1, %s13
  $region7: #{inverted_residual_forward.1} parent=0 // loop_footer_branch
    %12 = sbr.rel target = $region3
  $region8: #{inverted_residual_forward.1} parent=0 // loop_exit
    _

</llo_original>
